<compile_context>
chip_gen: v5e
topology: v5e:2x2
jax: 0.10.0
libtpu: 0.0.40
codegen_flags: <defaults>
</compile_context>

<pallas_src>
import numpy as np
import jax
import jax.numpy as jnp
from jax.experimental import pallas as pl
from jax.experimental.pallas import tpu as pltpu


def make_bilinear_matrix(out_size, in_size):
    """Interpolation matrix for UpsamplingBilinear2d (align_corners=True)."""
    W = np.zeros((out_size, in_size), dtype=np.float32)
    if out_size == 1:
        W[0, 0] = 1.0
        return W
    scale = (in_size - 1) / (out_size - 1)
    for i in range(out_size):
        src = i * scale
        i0 = min(int(np.floor(src)), in_size - 1)
        i1 = min(i0 + 1, in_size - 1)
        frac = src - i0
        W[i, i0] += 1.0 - frac
        W[i, i1] += frac
    return W


def make_tap_masks(H, W):
    """(9, H*W) float32 validity masks for the 9 taps of a 3x3 conv with 1-pixel zero padding.

    Tap t = (dy, dx) with dy, dx in (-1, 0, 1); mask[t, y*W+x] = 1 iff (y+dy, x+dx) is in-bounds.
    """
    yy, xx = np.meshgrid(np.arange(H), np.arange(W), indexing="ij")
    yy = yy.reshape(-1)
    xx = xx.reshape(-1)
    masks = np.zeros((9, H * W), dtype=np.float32)
    t = 0
    for dy in (-1, 0, 1):
        for dx in (-1, 0, 1):
            valid = (yy + dy >= 0) & (yy + dy < H) & (xx + dx >= 0) & (xx + dx < W)
            masks[t] = valid.astype(np.float32)
            t += 1
    return masks


# ------------------------------ fused kernel --------------------------------

def _make_fused_kernel(H, W, C, has_skip):
    """Per-batch fused kernel: upsample -> (+skip) -> conv3x3+relu -> conv3x3 -> +residual -> relu.

    Activation layout: (C, H*W) -- channels on sublanes, spatial lane-dense.
    """
    HW = H * W
    taps = [(dy, dx) for dy in (-1, 0, 1) for dx in (-1, 0, 1)]

    def conv3x3(x_f32, w_ref, mask_ref):
        # x_f32: (C, HW) f32.  w_ref: (9, C_out, C_in) bf16.  Returns (C_out, HW) f32.
        # 9 accumulating matmuls on pltpu.roll-shifted views; border handled by the precomputed
        # per-tap mask (multiply by 0/1), so no padded scratch and no lane-offset copies.
        acc = jnp.zeros((C, HW), jnp.float32)
        for t, (dy, dx) in enumerate(taps):
            off = dy * W + dx                       # flat (h-major) shift of this tap
            if off == 0:
                shifted = x_f32                     # center tap: no shift, no mask needed
            else:
                shifted = pltpu.roll(x_f32, (-off) % HW, axis=1)      # XLU lane rotate
                shifted = shifted * mask_ref[t:t + 1, :]              # zero the wrapped border
            acc = acc + jnp.dot(w_ref[t], shifted.astype(jnp.bfloat16),
                                preferred_element_type=jnp.float32)
        return acc

    def kernel(*refs):
        if has_skip:
            (x_ref, ut_ref, mask_ref, skip_ref, w1_ref, b1_ref, w2_ref, b2_ref, o_ref) = refs
        else:
            (x_ref, ut_ref, mask_ref, w1_ref, b1_ref, w2_ref, b2_ref, o_ref) = refs
            skip_ref = None

        # ---- 1) bilinear upsample: one lane-dense (C,HWin)@(HWin,HWout) bf16 matmul, f32 acc ----
        up = jnp.dot(x_ref[0], ut_ref[...], preferred_element_type=jnp.float32)   # (C, HWout) f32
        if has_skip:
            up = up + skip_ref[0]                                                  # in-kernel skip add

        # ---- 2) conv1 (3x3, pad=1) + bias + relu ----
        h1 = jnp.maximum(conv3x3(up, w1_ref, mask_ref) + b1_ref[...], 0.0)        # (C, HWout) f32

        # ---- 3) conv2 (3x3, pad=1) + bias + residual + relu ----
        out = jnp.maximum(conv3x3(h1, w2_ref, mask_ref) + b2_ref[...] + up, 0.0)  # (C, HWout) f32

        o_ref[0] = out.astype(o_ref.dtype)                                         # lane-dense store

    return kernel


# -------------------------------- wrapper ------------------------------------

def upsample_a_forward(x, tgt_size, w1, b1, w2, b2, skip=None):
    """x: (B, C, Hin, Win) float32 (NCHW). skip (optional): (B, C, tgt, tgt).
    Returns (B, C, tgt, tgt) float32."""
    B, C, Hin, Win = x.shape
    Hout = Wout = int(tgt_size)
    HWin, HWout = Hin * Win, Hout * Wout

    # Combined (align_corners=True) bilinear matrix (h-major/w-minor flatten), transposed for the
    # (C, HW) layout: up(C,HWout) = x(C,HWin) @ U^T.  bf16 MXU operand.
    Ut = jnp.asarray(np.kron(make_bilinear_matrix(Hout, Hin),
                             make_bilinear_matrix(Wout, Win)).T).astype(jnp.bfloat16)  # (HWin, HWout)

    # Per-tap border-validity masks (f32 0/1), shared by both convs.
    masks = jnp.asarray(make_tap_masks(Hout, Wout))                                    # (9, HWout)

    # NCHW-flat activations: channels on sublanes, spatial lane-dense.  No transposes needed.
    x_flat = x.reshape(B, C, HWin).astype(jnp.bfloat16)

    # Conv weights HWIO (3,3,Cin,Cout) -> per-tap (9, Cout, Cin) bf16; biases (C,1) f32.
    w1t = jnp.transpose(w1, (0, 1, 3, 2)).reshape(9, C, C).astype(jnp.bfloat16)
    w2t = jnp.transpose(w2, (0, 1, 3, 2)).reshape(9, C, C).astype(jnp.bfloat16)
    b1r = b1.reshape(C, 1).astype(jnp.float32)
    b2r = b2.reshape(C, 1).astype(jnp.float32)

    has_skip = skip is not None

    inputs = [x_flat, Ut, masks]
    in_specs = [
        pl.BlockSpec((1, C, HWin), lambda b: (b, 0, 0)),
        pl.BlockSpec((HWin, HWout), lambda b: (0, 0)),
        pl.BlockSpec((9, HWout), lambda b: (0, 0)),
    ]
    if has_skip:
        inputs.append(skip.reshape(B, C, HWout).astype(jnp.float32))
        in_specs.append(pl.BlockSpec((1, C, HWout), lambda b: (b, 0, 0)))
    inputs += [w1t, b1r, w2t, b2r]
    in_specs += [
        pl.BlockSpec((9, C, C), lambda b: (0, 0, 0)),
        pl.BlockSpec((C, 1), lambda b: (0, 0)),
        pl.BlockSpec((9, C, C), lambda b: (0, 0, 0)),
        pl.BlockSpec((C, 1), lambda b: (0, 0)),
    ]

    kernel = _make_fused_kernel(Hout, Wout, C, has_skip)

    out_flat = pl.pallas_call(
        kernel,
        out_shape=jax.ShapeDtypeStruct((B, C, HWout), jnp.float32),
        grid=(B,),
        in_specs=in_specs,
        out_specs=pl.BlockSpec((1, C, HWout), lambda b: (b, 0, 0)),
        compiler_params=pltpu.CompilerParams(dimension_semantics=("parallel",)),
    )(*inputs)

    # Free reshape back to NCHW -- no transpose needed in this layout.
    return out_flat.reshape(B, C, Hout, Wout)


# ------------------------------- reference -----------------------------------

def reference_forward(x, tgt_size, w1, b1, w2, b2, skip=None):
    B, C, Hin, Win = x.shape
    Hout = Wout = int(tgt_size)
    Wh = jnp.asarray(make_bilinear_matrix(Hout, Hin))
    Ww = jnp.asarray(make_bilinear_matrix(Wout, Win))
    up = jnp.einsum('oh,bchw->bcow', Wh, x)
    up = jnp.einsum('pw,bchw->bchp', Ww, up)
    if skip is not None:
        up = up + skip
    xn = jnp.transpose(up, (0, 2, 3, 1))                           # NHWC
    dn = jax.lax.conv_dimension_numbers(xn.shape, w1.shape, ('NHWC', 'HWIO', 'NHWC'))
    h1 = jax.lax.conv_general_dilated(xn, w1, (1, 1), 'SAME', dimension_numbers=dn) + b1
    h1 = jnp.maximum(h1, 0.0)
    h2 = jax.lax.conv_general_dilated(h1, w2, (1, 1), 'SAME', dimension_numbers=dn) + b2
    out = jnp.maximum(h2 + xn, 0.0)
    return jnp.transpose(out, (0, 3, 1, 2))


# --------------------------------- main ---------------------------------------

if __name__ == "__main__":
    key = jax.random.PRNGKey(0)
    B, C, Hin, Win = 2, 4, 8, 8
    tgt_size = 16

    k1, k2, k3, k4, k5, k6 = jax.random.split(key, 6)
    x = jax.random.normal(k1, (B, C, Hin, Win), jnp.float32)
    # Conv2d(nchannels, nchannels, 3, padding=1) weights in HWIO layout, deterministic init.
    w1 = 0.1 * jax.random.normal(k2, (3, 3, C, C), jnp.float32)
    b1 = 0.1 * jax.random.normal(k3, (C,), jnp.float32)
    w2 = 0.1 * jax.random.normal(k4, (3, 3, C, C), jnp.float32)
    b2 = 0.1 * jax.random.normal(k5, (C,), jnp.float32)
    skip = 0.5 * jax.random.normal(k6, (B, C, tgt_size, tgt_size), jnp.float32)

    # bf16 matmul operands (f32 accumulation) give ~1e-2-level deviations vs the f32 reference.
    # no-skip path
    out = jax.block_until_ready(upsample_a_forward(x, tgt_size, w1, b1, w2, b2))
    ref = jax.block_until_ready(reference_forward(x, tgt_size, w1, b1, w2, b2))
    np.testing.assert_allclose(np.asarray(out), np.asarray(ref), rtol=3e-2, atol=3e-2)

    # skip path
    out_s = jax.block_until_ready(upsample_a_forward(x, tgt_size, w1, b1, w2, b2, skip=skip))
    ref_s = jax.block_until_ready(reference_forward(x, tgt_size, w1, b1, w2, b2, skip=skip))
    np.testing.assert_allclose(np.asarray(out_s), np.asarray(ref_s), rtol=3e-2, atol=3e-2)

    print("KERNEL_OK")
</pallas_src>

<mosaic_0001>
module attributes {stable_mosaic.version = 11 : i64} {
  func.func @kernel(%arg0: i32, %arg1: memref<1x4x64xbf16, #tpu.memory_space<vmem>>, %arg2: memref<64x256xbf16, #tpu.memory_space<vmem>>, %arg3: memref<9x256xf32, #tpu.memory_space<vmem>>, %arg4: memref<9x4x4xbf16, #tpu.memory_space<vmem>>, %arg5: memref<4x1xf32, #tpu.memory_space<vmem>>, %arg6: memref<9x4x4xbf16, #tpu.memory_space<vmem>>, %arg7: memref<4x1xf32, #tpu.memory_space<vmem>>, %arg8: memref<1x4x256xf32, #tpu.memory_space<vmem>>) attributes {dimension_semantics = [#tpu.dimension_semantics<parallel>], iteration_bounds = array<i64: 2>, scalar_prefetch = 0 : i64, scratch_operands = 0 : i64, tpu.core_type = #tpu.core_type<tc>, window_params = [{transform_indices = @transform_0, window_bounds = array<i64: 1, 4, 64>}, {pipeline_mode = #tpu.pipeline_mode<synchronous>, transform_indices = @transform_1, window_bounds = array<i64: 64, 256>}, {pipeline_mode = #tpu.pipeline_mode<synchronous>, transform_indices = @transform_2, window_bounds = array<i64: 9, 256>}, {pipeline_mode = #tpu.pipeline_mode<synchronous>, transform_indices = @transform_3, window_bounds = array<i64: 9, 4, 4>}, {pipeline_mode = #tpu.pipeline_mode<synchronous>, transform_indices = @transform_4, window_bounds = array<i64: 4, 1>}, {pipeline_mode = #tpu.pipeline_mode<synchronous>, transform_indices = @transform_5, window_bounds = array<i64: 9, 4, 4>}, {pipeline_mode = #tpu.pipeline_mode<synchronous>, transform_indices = @transform_6, window_bounds = array<i64: 4, 1>}, {transform_indices = @transform_7, window_bounds = array<i64: 1, 4, 256>}]} {
    %c0 = arith.constant 0 : index
    %c0_0 = arith.constant 0 : index
    %c0_1 = arith.constant 0 : index
    %0 = vector.load %arg1[%c0, %c0_0, %c0_1] : memref<1x4x64xbf16, #tpu.memory_space<vmem>>, vector<1x4x64xbf16>
    %1 = vector.shape_cast %0 : vector<1x4x64xbf16> to vector<4x64xbf16>
    %c0_2 = arith.constant 0 : index
    %c0_3 = arith.constant 0 : index
    %2 = vector.load %arg2[%c0_2, %c0_3] : memref<64x256xbf16, #tpu.memory_space<vmem>>, vector<64x256xbf16>
    %cst = arith.constant dense<0.000000e+00> : vector<4x256xf32>
    %3 = tpu.matmul %1, %2, %cst {dimension_numbers = #tpu.dot_dimension_numbers<[1], [0], [0], [1], [0, 0, 1, 1], [], []>} : vector<4x64xbf16>, vector<64x256xbf16>, vector<4x256xf32> -> vector<4x256xf32>
    %cst_4 = arith.constant 0.000000e+00 : f32
    %4 = vector.broadcast %cst_4 : f32 to vector<4x256xf32>
    %c17_i32 = arith.constant 17 : i32
    %5 = tpu.dynamic_rotate %3 by %c17_i32 dim 1 : vector<4x256xf32>, i32 -> vector<4x256xf32>
    %c0_5 = arith.constant 0 : index
    %c0_6 = arith.constant 0 : index
    %6 = vector.load %arg3[%c0_5, %c0_6] : memref<9x256xf32, #tpu.memory_space<vmem>>, vector<1x256xf32>
    %7 = vector.broadcast %6 : vector<1x256xf32> to vector<4x256xf32>
    %8 = arith.mulf %5, %7 : vector<4x256xf32>
    %c0_7 = arith.constant 0 : index
    %c0_8 = arith.constant 0 : index
    %c0_9 = arith.constant 0 : index
    %9 = vector.load %arg4[%c0_7, %c0_8, %c0_9] : memref<9x4x4xbf16, #tpu.memory_space<vmem>>, vector<1x4x4xbf16>
    %10 = vector.shape_cast %9 : vector<1x4x4xbf16> to vector<4x4xbf16>
    %11 = arith.truncf %8 : vector<4x256xf32> to vector<4x256xbf16>
    %cst_10 = arith.constant dense<0.000000e+00> : vector<4x256xf32>
    %12 = tpu.matmul %10, %11, %cst_10 {dimension_numbers = #tpu.dot_dimension_numbers<[1], [0], [0], [1], [0, 0, 1, 1], [], []>} : vector<4x4xbf16>, vector<4x256xbf16>, vector<4x256xf32> -> vector<4x256xf32>
    %13 = arith.addf %4, %12 : vector<4x256xf32>
    %c16_i32 = arith.constant 16 : i32
    %14 = tpu.dynamic_rotate %3 by %c16_i32 dim 1 : vector<4x256xf32>, i32 -> vector<4x256xf32>
    %c1 = arith.constant 1 : index
    %c0_11 = arith.constant 0 : index
    %15 = vector.load %arg3[%c1, %c0_11] : memref<9x256xf32, #tpu.memory_space<vmem>>, vector<1x256xf32>
    %16 = vector.broadcast %15 : vector<1x256xf32> to vector<4x256xf32>
    %17 = arith.mulf %14, %16 : vector<4x256xf32>
    %c1_12 = arith.constant 1 : index
    %c0_13 = arith.constant 0 : index
    %c0_14 = arith.constant 0 : index
    %18 = vector.load %arg4[%c1_12, %c0_13, %c0_14] : memref<9x4x4xbf16, #tpu.memory_space<vmem>>, vector<1x4x4xbf16>
    %19 = vector.shape_cast %18 : vector<1x4x4xbf16> to vector<4x4xbf16>
    %20 = arith.truncf %17 : vector<4x256xf32> to vector<4x256xbf16>
    %cst_15 = arith.constant dense<0.000000e+00> : vector<4x256xf32>
    %21 = tpu.matmul %19, %20, %cst_15 {dimension_numbers = #tpu.dot_dimension_numbers<[1], [0], [0], [1], [0, 0, 1, 1], [], []>} : vector<4x4xbf16>, vector<4x256xbf16>, vector<4x256xf32> -> vector<4x256xf32>
    %22 = arith.addf %13, %21 : vector<4x256xf32>
    %c15_i32 = arith.constant 15 : i32
    %23 = tpu.dynamic_rotate %3 by %c15_i32 dim 1 : vector<4x256xf32>, i32 -> vector<4x256xf32>
    %c2 = arith.constant 2 : index
    %c0_16 = arith.constant 0 : index
    %24 = vector.load %arg3[%c2, %c0_16] : memref<9x256xf32, #tpu.memory_space<vmem>>, vector<1x256xf32>
    %25 = vector.broadcast %24 : vector<1x256xf32> to vector<4x256xf32>
    %26 = arith.mulf %23, %25 : vector<4x256xf32>
    %c2_17 = arith.constant 2 : index
    %c0_18 = arith.constant 0 : index
    %c0_19 = arith.constant 0 : index
    %27 = vector.load %arg4[%c2_17, %c0_18, %c0_19] : memref<9x4x4xbf16, #tpu.memory_space<vmem>>, vector<1x4x4xbf16>
    %28 = vector.shape_cast %27 : vector<1x4x4xbf16> to vector<4x4xbf16>
    %29 = arith.truncf %26 : vector<4x256xf32> to vector<4x256xbf16>
    %cst_20 = arith.constant dense<0.000000e+00> : vector<4x256xf32>
    %30 = tpu.matmul %28, %29, %cst_20 {dimension_numbers = #tpu.dot_dimension_numbers<[1], [0], [0], [1], [0, 0, 1, 1], [], []>} : vector<4x4xbf16>, vector<4x256xbf16>, vector<4x256xf32> -> vector<4x256xf32>
    %31 = arith.addf %22, %30 : vector<4x256xf32>
    %c1_i32 = arith.constant 1 : i32
    %32 = tpu.dynamic_rotate %3 by %c1_i32 dim 1 : vector<4x256xf32>, i32 -> vector<4x256xf32>
    %c3 = arith.constant 3 : index
    %c0_21 = arith.constant 0 : index
    %33 = vector.load %arg3[%c3, %c0_21] : memref<9x256xf32, #tpu.memory_space<vmem>>, vector<1x256xf32>
    %34 = vector.broadcast %33 : vector<1x256xf32> to vector<4x256xf32>
    %35 = arith.mulf %32, %34 : vector<4x256xf32>
    %c3_22 = arith.constant 3 : index
    %c0_23 = arith.constant 0 : index
    %c0_24 = arith.constant 0 : index
    %36 = vector.load %arg4[%c3_22, %c0_23, %c0_24] : memref<9x4x4xbf16, #tpu.memory_space<vmem>>, vector<1x4x4xbf16>
    %37 = vector.shape_cast %36 : vector<1x4x4xbf16> to vector<4x4xbf16>
    %38 = arith.truncf %35 : vector<4x256xf32> to vector<4x256xbf16>
    %cst_25 = arith.constant dense<0.000000e+00> : vector<4x256xf32>
    %39 = tpu.matmul %37, %38, %cst_25 {dimension_numbers = #tpu.dot_dimension_numbers<[1], [0], [0], [1], [0, 0, 1, 1], [], []>} : vector<4x4xbf16>, vector<4x256xbf16>, vector<4x256xf32> -> vector<4x256xf32>
    %40 = arith.addf %31, %39 : vector<4x256xf32>
    %c4 = arith.constant 4 : index
    %c0_26 = arith.constant 0 : index
    %c0_27 = arith.constant 0 : index
    %41 = vector.load %arg4[%c4, %c0_26, %c0_27] : memref<9x4x4xbf16, #tpu.memory_space<vmem>>, vector<1x4x4xbf16>
    %42 = vector.shape_cast %41 : vector<1x4x4xbf16> to vector<4x4xbf16>
    %43 = arith.truncf %3 : vector<4x256xf32> to vector<4x256xbf16>
    %cst_28 = arith.constant dense<0.000000e+00> : vector<4x256xf32>
    %44 = tpu.matmul %42, %43, %cst_28 {dimension_numbers = #tpu.dot_dimension_numbers<[1], [0], [0], [1], [0, 0, 1, 1], [], []>} : vector<4x4xbf16>, vector<4x256xbf16>, vector<4x256xf32> -> vector<4x256xf32>
    %45 = arith.addf %40, %44 : vector<4x256xf32>
    %c255_i32 = arith.constant 255 : i32
    %46 = tpu.dynamic_rotate %3 by %c255_i32 dim 1 : vector<4x256xf32>, i32 -> vector<4x256xf32>
    %c5 = arith.constant 5 : index
    %c0_29 = arith.constant 0 : index
    %47 = vector.load %arg3[%c5, %c0_29] : memref<9x256xf32, #tpu.memory_space<vmem>>, vector<1x256xf32>
    %48 = vector.broadcast %47 : vector<1x256xf32> to vector<4x256xf32>
    %49 = arith.mulf %46, %48 : vector<4x256xf32>
    %c5_30 = arith.constant 5 : index
    %c0_31 = arith.constant 0 : index
    %c0_32 = arith.constant 0 : index
    %50 = vector.load %arg4[%c5_30, %c0_31, %c0_32] : memref<9x4x4xbf16, #tpu.memory_space<vmem>>, vector<1x4x4xbf16>
    %51 = vector.shape_cast %50 : vector<1x4x4xbf16> to vector<4x4xbf16>
    %52 = arith.truncf %49 : vector<4x256xf32> to vector<4x256xbf16>
    %cst_33 = arith.constant dense<0.000000e+00> : vector<4x256xf32>
    %53 = tpu.matmul %51, %52, %cst_33 {dimension_numbers = #tpu.dot_dimension_numbers<[1], [0], [0], [1], [0, 0, 1, 1], [], []>} : vector<4x4xbf16>, vector<4x256xbf16>, vector<4x256xf32> -> vector<4x256xf32>
    %54 = arith.addf %45, %53 : vector<4x256xf32>
    %c241_i32 = arith.constant 241 : i32
    %55 = tpu.dynamic_rotate %3 by %c241_i32 dim 1 : vector<4x256xf32>, i32 -> vector<4x256xf32>
    %c6 = arith.constant 6 : index
    %c0_34 = arith.constant 0 : index
    %56 = vector.load %arg3[%c6, %c0_34] : memref<9x256xf32, #tpu.memory_space<vmem>>, vector<1x256xf32>
    %57 = vector.broadcast %56 : vector<1x256xf32> to vector<4x256xf32>
    %58 = arith.mulf %55, %57 : vector<4x256xf32>
    %c6_35 = arith.constant 6 : index
    %c0_36 = arith.constant 0 : index
    %c0_37 = arith.constant 0 : index
    %59 = vector.load %arg4[%c6_35, %c0_36, %c0_37] : memref<9x4x4xbf16, #tpu.memory_space<vmem>>, vector<1x4x4xbf16>
    %60 = vector.shape_cast %59 : vector<1x4x4xbf16> to vector<4x4xbf16>
    %61 = arith.truncf %58 : vector<4x256xf32> to vector<4x256xbf16>
    %cst_38 = arith.constant dense<0.000000e+00> : vector<4x256xf32>
    %62 = tpu.matmul %60, %61, %cst_38 {dimension_numbers = #tpu.dot_dimension_numbers<[1], [0], [0], [1], [0, 0, 1, 1], [], []>} : vector<4x4xbf16>, vector<4x256xbf16>, vector<4x256xf32> -> vector<4x256xf32>
    %63 = arith.addf %54, %62 : vector<4x256xf32>
    %c240_i32 = arith.constant 240 : i32
    %64 = tpu.dynamic_rotate %3 by %c240_i32 dim 1 : vector<4x256xf32>, i32 -> vector<4x256xf32>
    %c7 = arith.constant 7 : index
    %c0_39 = arith.constant 0 : index
    %65 = vector.load %arg3[%c7, %c0_39] : memref<9x256xf32, #tpu.memory_space<vmem>>, vector<1x256xf32>
    %66 = vector.broadcast %65 : vector<1x256xf32> to vector<4x256xf32>
    %67 = arith.mulf %64, %66 : vector<4x256xf32>
    %c7_40 = arith.constant 7 : index
    %c0_41 = arith.constant 0 : index
    %c0_42 = arith.constant 0 : index
    %68 = vector.load %arg4[%c7_40, %c0_41, %c0_42] : memref<9x4x4xbf16, #tpu.memory_space<vmem>>, vector<1x4x4xbf16>
    %69 = vector.shape_cast %68 : vector<1x4x4xbf16> to vector<4x4xbf16>
    %70 = arith.truncf %67 : vector<4x256xf32> to vector<4x256xbf16>
    %cst_43 = arith.constant dense<0.000000e+00> : vector<4x256xf32>
    %71 = tpu.matmul %69, %70, %cst_43 {dimension_numbers = #tpu.dot_dimension_numbers<[1], [0], [0], [1], [0, 0, 1, 1], [], []>} : vector<4x4xbf16>, vector<4x256xbf16>, vector<4x256xf32> -> vector<4x256xf32>
    %72 = arith.addf %63, %71 : vector<4x256xf32>
    %c239_i32 = arith.constant 239 : i32
    %73 = tpu.dynamic_rotate %3 by %c239_i32 dim 1 : vector<4x256xf32>, i32 -> vector<4x256xf32>
    %c8 = arith.constant 8 : index
    %c0_44 = arith.constant 0 : index
    %74 = vector.load %arg3[%c8, %c0_44] : memref<9x256xf32, #tpu.memory_space<vmem>>, vector<1x256xf32>
    %75 = vector.broadcast %74 : vector<1x256xf32> to vector<4x256xf32>
    %76 = arith.mulf %73, %75 : vector<4x256xf32>
    %c8_45 = arith.constant 8 : index
    %c0_46 = arith.constant 0 : index
    %c0_47 = arith.constant 0 : index
    %77 = vector.load %arg4[%c8_45, %c0_46, %c0_47] : memref<9x4x4xbf16, #tpu.memory_space<vmem>>, vector<1x4x4xbf16>
    %78 = vector.shape_cast %77 : vector<1x4x4xbf16> to vector<4x4xbf16>
    %79 = arith.truncf %76 : vector<4x256xf32> to vector<4x256xbf16>
    %cst_48 = arith.constant dense<0.000000e+00> : vector<4x256xf32>
    %80 = tpu.matmul %78, %79, %cst_48 {dimension_numbers = #tpu.dot_dimension_numbers<[1], [0], [0], [1], [0, 0, 1, 1], [], []>} : vector<4x4xbf16>, vector<4x256xbf16>, vector<4x256xf32> -> vector<4x256xf32>
    %81 = arith.addf %72, %80 : vector<4x256xf32>
    %c0_49 = arith.constant 0 : index
    %c0_50 = arith.constant 0 : index
    %82 = vector.load %arg5[%c0_49, %c0_50] : memref<4x1xf32, #tpu.memory_space<vmem>>, vector<4x1xf32>
    %83 = vector.broadcast %82 : vector<4x1xf32> to vector<4x256xf32>
    %84 = arith.addf %81, %83 : vector<4x256xf32>
    %cst_51 = arith.constant 0.000000e+00 : f32
    %85 = vector.broadcast %cst_51 : f32 to vector<4x256xf32>
    %86 = arith.maximumf %84, %85 : vector<4x256xf32>
    %cst_52 = arith.constant 0.000000e+00 : f32
    %87 = vector.broadcast %cst_52 : f32 to vector<4x256xf32>
    %c17_i32_53 = arith.constant 17 : i32
    %88 = tpu.dynamic_rotate %86 by %c17_i32_53 dim 1 : vector<4x256xf32>, i32 -> vector<4x256xf32>
    %c0_54 = arith.constant 0 : index
    %c0_55 = arith.constant 0 : index
    %89 = vector.load %arg3[%c0_54, %c0_55] : memref<9x256xf32, #tpu.memory_space<vmem>>, vector<1x256xf32>
    %90 = vector.broadcast %89 : vector<1x256xf32> to vector<4x256xf32>
    %91 = arith.mulf %88, %90 : vector<4x256xf32>
    %c0_56 = arith.constant 0 : index
    %c0_57 = arith.constant 0 : index
    %c0_58 = arith.constant 0 : index
    %92 = vector.load %arg6[%c0_56, %c0_57, %c0_58] : memref<9x4x4xbf16, #tpu.memory_space<vmem>>, vector<1x4x4xbf16>
    %93 = vector.shape_cast %92 : vector<1x4x4xbf16> to vector<4x4xbf16>
    %94 = arith.truncf %91 : vector<4x256xf32> to vector<4x256xbf16>
    %cst_59 = arith.constant dense<0.000000e+00> : vector<4x256xf32>
    %95 = tpu.matmul %93, %94, %cst_59 {dimension_numbers = #tpu.dot_dimension_numbers<[1], [0], [0], [1], [0, 0, 1, 1], [], []>} : vector<4x4xbf16>, vector<4x256xbf16>, vector<4x256xf32> -> vector<4x256xf32>
    %96 = arith.addf %87, %95 : vector<4x256xf32>
    %c16_i32_60 = arith.constant 16 : i32
    %97 = tpu.dynamic_rotate %86 by %c16_i32_60 dim 1 : vector<4x256xf32>, i32 -> vector<4x256xf32>
    %c1_61 = arith.constant 1 : index
    %c0_62 = arith.constant 0 : index
    %98 = vector.load %arg3[%c1_61, %c0_62] : memref<9x256xf32, #tpu.memory_space<vmem>>, vector<1x256xf32>
    %99 = vector.broadcast %98 : vector<1x256xf32> to vector<4x256xf32>
    %100 = arith.mulf %97, %99 : vector<4x256xf32>
    %c1_63 = arith.constant 1 : index
    %c0_64 = arith.constant 0 : index
    %c0_65 = arith.constant 0 : index
    %101 = vector.load %arg6[%c1_63, %c0_64, %c0_65] : memref<9x4x4xbf16, #tpu.memory_space<vmem>>, vector<1x4x4xbf16>
    %102 = vector.shape_cast %101 : vector<1x4x4xbf16> to vector<4x4xbf16>
    %103 = arith.truncf %100 : vector<4x256xf32> to vector<4x256xbf16>
    %cst_66 = arith.constant dense<0.000000e+00> : vector<4x256xf32>
    %104 = tpu.matmul %102, %103, %cst_66 {dimension_numbers = #tpu.dot_dimension_numbers<[1], [0], [0], [1], [0, 0, 1, 1], [], []>} : vector<4x4xbf16>, vector<4x256xbf16>, vector<4x256xf32> -> vector<4x256xf32>
    %105 = arith.addf %96, %104 : vector<4x256xf32>
    %c15_i32_67 = arith.constant 15 : i32
    %106 = tpu.dynamic_rotate %86 by %c15_i32_67 dim 1 : vector<4x256xf32>, i32 -> vector<4x256xf32>
    %c2_68 = arith.constant 2 : index
    %c0_69 = arith.constant 0 : index
    %107 = vector.load %arg3[%c2_68, %c0_69] : memref<9x256xf32, #tpu.memory_space<vmem>>, vector<1x256xf32>
    %108 = vector.broadcast %107 : vector<1x256xf32> to vector<4x256xf32>
    %109 = arith.mulf %106, %108 : vector<4x256xf32>
    %c2_70 = arith.constant 2 : index
    %c0_71 = arith.constant 0 : index
    %c0_72 = arith.constant 0 : index
    %110 = vector.load %arg6[%c2_70, %c0_71, %c0_72] : memref<9x4x4xbf16, #tpu.memory_space<vmem>>, vector<1x4x4xbf16>
    %111 = vector.shape_cast %110 : vector<1x4x4xbf16> to vector<4x4xbf16>
    %112 = arith.truncf %109 : vector<4x256xf32> to vector<4x256xbf16>
    %cst_73 = arith.constant dense<0.000000e+00> : vector<4x256xf32>
    %113 = tpu.matmul %111, %112, %cst_73 {dimension_numbers = #tpu.dot_dimension_numbers<[1], [0], [0], [1], [0, 0, 1, 1], [], []>} : vector<4x4xbf16>, vector<4x256xbf16>, vector<4x256xf32> -> vector<4x256xf32>
    %114 = arith.addf %105, %113 : vector<4x256xf32>
    %c1_i32_74 = arith.constant 1 : i32
    %115 = tpu.dynamic_rotate %86 by %c1_i32_74 dim 1 : vector<4x256xf32>, i32 -> vector<4x256xf32>
    %c3_75 = arith.constant 3 : index
    %c0_76 = arith.constant 0 : index
    %116 = vector.load %arg3[%c3_75, %c0_76] : memref<9x256xf32, #tpu.memory_space<vmem>>, vector<1x256xf32>
    %117 = vector.broadcast %116 : vector<1x256xf32> to vector<4x256xf32>
    %118 = arith.mulf %115, %117 : vector<4x256xf32>
    %c3_77 = arith.constant 3 : index
    %c0_78 = arith.constant 0 : index
    %c0_79 = arith.constant 0 : index
    %119 = vector.load %arg6[%c3_77, %c0_78, %c0_79] : memref<9x4x4xbf16, #tpu.memory_space<vmem>>, vector<1x4x4xbf16>
    %120 = vector.shape_cast %119 : vector<1x4x4xbf16> to vector<4x4xbf16>
    %121 = arith.truncf %118 : vector<4x256xf32> to vector<4x256xbf16>
    %cst_80 = arith.constant dense<0.000000e+00> : vector<4x256xf32>
    %122 = tpu.matmul %120, %121, %cst_80 {dimension_numbers = #tpu.dot_dimension_numbers<[1], [0], [0], [1], [0, 0, 1, 1], [], []>} : vector<4x4xbf16>, vector<4x256xbf16>, vector<4x256xf32> -> vector<4x256xf32>
    %123 = arith.addf %114, %122 : vector<4x256xf32>
    %c4_81 = arith.constant 4 : index
    %c0_82 = arith.constant 0 : index
    %c0_83 = arith.constant 0 : index
    %124 = vector.load %arg6[%c4_81, %c0_82, %c0_83] : memref<9x4x4xbf16, #tpu.memory_space<vmem>>, vector<1x4x4xbf16>
    %125 = vector.shape_cast %124 : vector<1x4x4xbf16> to vector<4x4xbf16>
    %126 = arith.truncf %86 : vector<4x256xf32> to vector<4x256xbf16>
    %cst_84 = arith.constant dense<0.000000e+00> : vector<4x256xf32>
    %127 = tpu.matmul %125, %126, %cst_84 {dimension_numbers = #tpu.dot_dimension_numbers<[1], [0], [0], [1], [0, 0, 1, 1], [], []>} : vector<4x4xbf16>, vector<4x256xbf16>, vector<4x256xf32> -> vector<4x256xf32>
    %128 = arith.addf %123, %127 : vector<4x256xf32>
    %c255_i32_85 = arith.constant 255 : i32
    %129 = tpu.dynamic_rotate %86 by %c255_i32_85 dim 1 : vector<4x256xf32>, i32 -> vector<4x256xf32>
    %c5_86 = arith.constant 5 : index
    %c0_87 = arith.constant 0 : index
    %130 = vector.load %arg3[%c5_86, %c0_87] : memref<9x256xf32, #tpu.memory_space<vmem>>, vector<1x256xf32>
    %131 = vector.broadcast %130 : vector<1x256xf32> to vector<4x256xf32>
    %132 = arith.mulf %129, %131 : vector<4x256xf32>
    %c5_88 = arith.constant 5 : index
    %c0_89 = arith.constant 0 : index
    %c0_90 = arith.constant 0 : index
    %133 = vector.load %arg6[%c5_88, %c0_89, %c0_90] : memref<9x4x4xbf16, #tpu.memory_space<vmem>>, vector<1x4x4xbf16>
    %134 = vector.shape_cast %133 : vector<1x4x4xbf16> to vector<4x4xbf16>
    %135 = arith.truncf %132 : vector<4x256xf32> to vector<4x256xbf16>
    %cst_91 = arith.constant dense<0.000000e+00> : vector<4x256xf32>
    %136 = tpu.matmul %134, %135, %cst_91 {dimension_numbers = #tpu.dot_dimension_numbers<[1], [0], [0], [1], [0, 0, 1, 1], [], []>} : vector<4x4xbf16>, vector<4x256xbf16>, vector<4x256xf32> -> vector<4x256xf32>
    %137 = arith.addf %128, %136 : vector<4x256xf32>
    %c241_i32_92 = arith.constant 241 : i32
    %138 = tpu.dynamic_rotate %86 by %c241_i32_92 dim 1 : vector<4x256xf32>, i32 -> vector<4x256xf32>
    %c6_93 = arith.constant 6 : index
    %c0_94 = arith.constant 0 : index
    %139 = vector.load %arg3[%c6_93, %c0_94] : memref<9x256xf32, #tpu.memory_space<vmem>>, vector<1x256xf32>
    %140 = vector.broadcast %139 : vector<1x256xf32> to vector<4x256xf32>
    %141 = arith.mulf %138, %140 : vector<4x256xf32>
    %c6_95 = arith.constant 6 : index
    %c0_96 = arith.constant 0 : index
    %c0_97 = arith.constant 0 : index
    %142 = vector.load %arg6[%c6_95, %c0_96, %c0_97] : memref<9x4x4xbf16, #tpu.memory_space<vmem>>, vector<1x4x4xbf16>
    %143 = vector.shape_cast %142 : vector<1x4x4xbf16> to vector<4x4xbf16>
    %144 = arith.truncf %141 : vector<4x256xf32> to vector<4x256xbf16>
    %cst_98 = arith.constant dense<0.000000e+00> : vector<4x256xf32>
    %145 = tpu.matmul %143, %144, %cst_98 {dimension_numbers = #tpu.dot_dimension_numbers<[1], [0], [0], [1], [0, 0, 1, 1], [], []>} : vector<4x4xbf16>, vector<4x256xbf16>, vector<4x256xf32> -> vector<4x256xf32>
    %146 = arith.addf %137, %145 : vector<4x256xf32>
    %c240_i32_99 = arith.constant 240 : i32
    %147 = tpu.dynamic_rotate %86 by %c240_i32_99 dim 1 : vector<4x256xf32>, i32 -> vector<4x256xf32>
    %c7_100 = arith.constant 7 : index
    %c0_101 = arith.constant 0 : index
    %148 = vector.load %arg3[%c7_100, %c0_101] : memref<9x256xf32, #tpu.memory_space<vmem>>, vector<1x256xf32>
    %149 = vector.broadcast %148 : vector<1x256xf32> to vector<4x256xf32>
    %150 = arith.mulf %147, %149 : vector<4x256xf32>
    %c7_102 = arith.constant 7 : index
    %c0_103 = arith.constant 0 : index
    %c0_104 = arith.constant 0 : index
    %151 = vector.load %arg6[%c7_102, %c0_103, %c0_104] : memref<9x4x4xbf16, #tpu.memory_space<vmem>>, vector<1x4x4xbf16>
    %152 = vector.shape_cast %151 : vector<1x4x4xbf16> to vector<4x4xbf16>
    %153 = arith.truncf %150 : vector<4x256xf32> to vector<4x256xbf16>
    %cst_105 = arith.constant dense<0.000000e+00> : vector<4x256xf32>
    %154 = tpu.matmul %152, %153, %cst_105 {dimension_numbers = #tpu.dot_dimension_numbers<[1], [0], [0], [1], [0, 0, 1, 1], [], []>} : vector<4x4xbf16>, vector<4x256xbf16>, vector<4x256xf32> -> vector<4x256xf32>
    %155 = arith.addf %146, %154 : vector<4x256xf32>
    %c239_i32_106 = arith.constant 239 : i32
    %156 = tpu.dynamic_rotate %86 by %c239_i32_106 dim 1 : vector<4x256xf32>, i32 -> vector<4x256xf32>
    %c8_107 = arith.constant 8 : index
    %c0_108 = arith.constant 0 : index
    %157 = vector.load %arg3[%c8_107, %c0_108] : memref<9x256xf32, #tpu.memory_space<vmem>>, vector<1x256xf32>
    %158 = vector.broadcast %157 : vector<1x256xf32> to vector<4x256xf32>
    %159 = arith.mulf %156, %158 : vector<4x256xf32>
    %c8_109 = arith.constant 8 : index
    %c0_110 = arith.constant 0 : index
    %c0_111 = arith.constant 0 : index
    %160 = vector.load %arg6[%c8_109, %c0_110, %c0_111] : memref<9x4x4xbf16, #tpu.memory_space<vmem>>, vector<1x4x4xbf16>
    %161 = vector.shape_cast %160 : vector<1x4x4xbf16> to vector<4x4xbf16>
    %162 = arith.truncf %159 : vector<4x256xf32> to vector<4x256xbf16>
    %cst_112 = arith.constant dense<0.000000e+00> : vector<4x256xf32>
    %163 = tpu.matmul %161, %162, %cst_112 {dimension_numbers = #tpu.dot_dimension_numbers<[1], [0], [0], [1], [0, 0, 1, 1], [], []>} : vector<4x4xbf16>, vector<4x256xbf16>, vector<4x256xf32> -> vector<4x256xf32>
    %164 = arith.addf %155, %163 : vector<4x256xf32>
    %c0_113 = arith.constant 0 : index
    %c0_114 = arith.constant 0 : index
    %165 = vector.load %arg7[%c0_113, %c0_114] : memref<4x1xf32, #tpu.memory_space<vmem>>, vector<4x1xf32>
    %166 = vector.broadcast %165 : vector<4x1xf32> to vector<4x256xf32>
    %167 = arith.addf %164, %166 : vector<4x256xf32>
    %168 = arith.addf %167, %3 : vector<4x256xf32>
    %cst_115 = arith.constant 0.000000e+00 : f32
    %169 = vector.broadcast %cst_115 : f32 to vector<4x256xf32>
    %170 = arith.maximumf %168, %169 : vector<4x256xf32>
    %c0_116 = arith.constant 0 : index
    %c0_117 = arith.constant 0 : index
    %c0_118 = arith.constant 0 : index
    %171 = vector.load %arg8[%c0_116, %c0_117, %c0_118] : memref<1x4x256xf32, #tpu.memory_space<vmem>>, vector<1x4x256xf32>
    %172 = vector.shape_cast %171 : vector<1x4x256xf32> to vector<4x256xf32>
    %173 = vector.shape_cast %170 : vector<4x256xf32> to vector<1x4x256xf32>
    tpu.vector_store %arg8[%c0_116, %c0_117, %c0_118], %173 {strides = array<i32>} : memref<1x4x256xf32, #tpu.memory_space<vmem>>, vector<1x4x256xf32>,
    return
  }
  func.func @transform_0(%arg0: i32) -> (i32, i32, i32) {
    %c0_i32 = arith.constant 0 : i32
    %c0_i32_0 = arith.constant 0 : i32
    %c0_i32_1 = arith.constant 0 : i32
    return %arg0, %c0_i32, %c0_i32_0 : i32, i32, i32
  }
  func.func @transform_1(%arg0: i32) -> (i32, i32) {
    %c0_i32 = arith.constant 0 : i32
    %c0_i32_0 = arith.constant 0 : i32
    %c0_i32_1 = arith.constant 0 : i32
    return %c0_i32, %c0_i32_0 : i32, i32
  }
  func.func @transform_2(%arg0: i32) -> (i32, i32) {
    %c0_i32 = arith.constant 0 : i32
    %c0_i32_0 = arith.constant 0 : i32
    %c0_i32_1 = arith.constant 0 : i32
    return %c0_i32, %c0_i32_0 : i32, i32
  }
  func.func @transform_3(%arg0: i32) -> (i32, i32, i32) {
    %c0_i32 = arith.constant 0 : i32
    %c0_i32_0 = arith.constant 0 : i32
    %c0_i32_1 = arith.constant 0 : i32
    %c0_i32_2 = arith.constant 0 : i32
    return %c0_i32, %c0_i32_0, %c0_i32_1 : i32, i32, i32
  }
  func.func @transform_4(%arg0: i32) -> (i32, i32) {
    %c0_i32 = arith.constant 0 : i32
    %c0_i32_0 = arith.constant 0 : i32
    %c0_i32_1 = arith.constant 0 : i32
    return %c0_i32, %c0_i32_0 : i32, i32
  }
  func.func @transform_5(%arg0: i32) -> (i32, i32, i32) {
    %c0_i32 = arith.constant 0 : i32
    %c0_i32_0 = arith.constant 0 : i32
    %c0_i32_1 = arith.constant 0 : i32
    %c0_i32_2 = arith.constant 0 : i32
    return %c0_i32, %c0_i32_0, %c0_i32_1 : i32, i32, i32
  }
  func.func @transform_6(%arg0: i32) -> (i32, i32) {
    %c0_i32 = arith.constant 0 : i32
    %c0_i32_0 = arith.constant 0 : i32
    %c0_i32_1 = arith.constant 0 : i32
    return %c0_i32, %c0_i32_0 : i32, i32
  }
  func.func @transform_7(%arg0: i32) -> (i32, i32, i32) {
    %c0_i32 = arith.constant 0 : i32
    %c0_i32_0 = arith.constant 0 : i32
    %c0_i32_1 = arith.constant 0 : i32
    return %arg0, %c0_i32, %c0_i32_0 : i32, i32, i32
  }
}

</mosaic_0001>

<llo_original>
// kernel: tpu_custom_call.1
$region0: #{tpu_custom_call.1}
  #allocation0 [shape = 'u32[]', space=smem, size = 0x4, offset = 0x4, fixed_abs, tag = 'smem constant byte address 0x4 - core index']
  #allocation1 [shape = 'u32[72,128]{1,0:T(1,128)}', space=vmem, size = 0x9000, scoped, tag = 'internal scratch']
  %s0 = inlined_call_operand.vmem [shape: bf16[2,4,64], index: 0, kind: input, shape index: {}]
  %s1 = inlined_call_operand.hbm [shape: bf16[64,256], index: 1, kind: input, shape index: {}]
  %s2 = inlined_call_operand.vmem [shape: f32[9,256], index: 2, kind: input, shape index: {}]
  %s3 = inlined_call_operand.vmem [shape: bf16[9,4,4], index: 3, kind: input, shape index: {}]
  %s4 = inlined_call_operand.vmem [shape: f32[4,1], index: 4, kind: input, shape index: {}]
  %s5 = inlined_call_operand.vmem [shape: bf16[9,4,4], index: 5, kind: input, shape index: {}]
  %s6 = inlined_call_operand.vmem [shape: f32[4,1], index: 6, kind: input, shape index: {}]
  %s7 = inlined_call_operand.hbm [shape: f32[2,4,256], index: 7, kind: output, shape index: {}]
  %s8 = sld [smem:[#allocation0]]
  $region65: #{tpu_custom_call.1} parent=0
    _
  %s10 = ssub.s32 1, %s8
  %s11 = scalar_select 0, %s10, %s8
  $region1: #{tpu_custom_call.1} parent=0
    #allocation2 [shape = 'u8[32768]{0}', space=vmem, size = 0x8000, scoped, tag = 'input window, operand 1, single buffered']
    #allocation3 [shape = 's32[2]{0}', space=sflag, size = 0x8, scoped, tag = 'scoped memory for tpu_custom_call.1']
    #allocation4 [shape = 's32[2]{0}', space=sflag, size = 0x8, scoped, tag = 'scoped memory for tpu_custom_call.1']
    #allocation5 [shape = 'u8[8192]{0}', space=vmem, size = 0x2000, scoped, tag = 'output window, operand 0']
    %12 = vsyncpa [#allocation3], 0
    %13 = vsyncpa [#allocation4], 0
    %s14 = scalar_lea.sflag [#allocation4], 1
    %15 = vsyncpa %s14, 0
    loop: start=0, step=1, limit=4
    $region2: #{tpu_custom_call.1} parent=1 // loop_pre_header
      _
    $region3: #{tpu_custom_call.1} parent=1 // loop_header
      %s17 = sphi 0, %s21
      %p18 = scmp.ge.s32.totalorder %s17, 4
      %s27 = sphi 0, %s29
      %s30 = sphi 0, %s27
      %s31 = sphi 0, %s30
      %s47 = sphi 0, %s31
      %s51 = sphi 0, %s51
      %s53 = sphi 0, %s51
      %s54 = sphi 0, %s53
      %s68 = sphi 0, %s54
      %s72 = sphi 0, %s72
      %s74 = sphi 0, %s72
      %s75 = sphi 0, %s74
      %s89 = sphi 0, %s75
      %s93 = sphi 0, %s93
      %s95 = sphi 0, %s93
      %s96 = sphi 0, %s95
      %s110 = sphi 0, %s96
      %s114 = sphi 0, %s114
      %s116 = sphi 0, %s114
      %s117 = sphi 0, %s116
      %s131 = sphi 0, %s117
      %s135 = sphi 0, %s135
      %s137 = sphi 0, %s135
      %s138 = sphi 0, %s137
      %s152 = sphi 0, %s138
      %s156 = sphi 0, %s156
      %s158 = sphi 0, %s156
      %s159 = sphi 0, %s158
      %s173 = sphi 0, %s159
      %s179 = sphi 0, %s181
      %s182 = sphi 0, %s179
      %s183 = sphi 0, %s182
      %s199 = sphi 0, %s183
    $region4: #{tpu_custom_call.1} parent=1 // loop_header_branch
      %20 = sbr.rel (%p18) target = $region8
    $region5: #{tpu_custom_call.1} parent=1 // loop_body
      %s22 = ssub.s32 %s17, 1
      %s23 = ssub.s32 %s17, 2
      %s24 = sadd.s32 %s17, 1
      %s25 = ssub.s32 %s17, %s24
      %p26 = scmp.eq.s32.totalorder %s25, 0
      %s28 = sadd.s32 %s27, 1
      %s29 = scalar_select %p26, %s27, %s28
      %p32 = pneg %p26
      %p33 = scmp.eq.s32.totalorder %s17, 1
      %p34 = por %p32, %p33
      %p35 = scmp.ne.s32.totalorder %s27, %s30
      %p36 = scmp.eq.s32.totalorder %s17, 0
      %p37 = por %p35, %p36
      %p38 = scmp.ne.s32.totalorder %s27, %s30
      %p39 = scmp.eq.s32.totalorder %s22, 1
      %p40 = por %p38, %p39
      %p41 = scmp.ne.s32.totalorder %s30, %s31
      %p42 = scmp.eq.s32.totalorder %s22, 0
      %p43 = por %p41, %p42
      %p44 = scmp.ne.s32.totalorder %s30, %s31
      %p45 = scmp.eq.s32.totalorder %s23, 1
      %p46 = por %p44, %p45
      %p48 = scmp.ne.s32.totalorder %s31, %s47
      %p49 = scmp.eq.s32.totalorder %s23, 0
      %p50 = por %p48, %p49
      %s52 = sadd.s32 %s51, 1
      %p55 = scmp.eq.s32.totalorder %s17, 1
      %p56 = scmp.ne.s32.totalorder %s51, %s53
      %p57 = scmp.eq.s32.totalorder %s17, 0
      %p58 = por %p56, %p57
      %p59 = scmp.ne.s32.totalorder %s51, %s53
      %p60 = scmp.eq.s32.totalorder %s22, 1
      %p61 = por %p59, %p60
      %p62 = scmp.ne.s32.totalorder %s53, %s54
      %p63 = scmp.eq.s32.totalorder %s22, 0
      %p64 = por %p62, %p63
      %p65 = scmp.ne.s32.totalorder %s53, %s54
      %p66 = scmp.eq.s32.totalorder %s23, 1
      %p67 = por %p65, %p66
      %p69 = scmp.ne.s32.totalorder %s54, %s68
      %p70 = scmp.eq.s32.totalorder %s23, 0
      %p71 = por %p69, %p70
      %s73 = sadd.s32 %s72, 1
      %p76 = scmp.eq.s32.totalorder %s17, 1
      %p77 = scmp.ne.s32.totalorder %s72, %s74
      %p78 = scmp.eq.s32.totalorder %s17, 0
      %p79 = por %p77, %p78
      %p80 = scmp.ne.s32.totalorder %s72, %s74
      %p81 = scmp.eq.s32.totalorder %s22, 1
      %p82 = por %p80, %p81
      %p83 = scmp.ne.s32.totalorder %s74, %s75
      %p84 = scmp.eq.s32.totalorder %s22, 0
      %p85 = por %p83, %p84
      %p86 = scmp.ne.s32.totalorder %s74, %s75
      %p87 = scmp.eq.s32.totalorder %s23, 1
      %p88 = por %p86, %p87
      %p90 = scmp.ne.s32.totalorder %s75, %s89
      %p91 = scmp.eq.s32.totalorder %s23, 0
      %p92 = por %p90, %p91
      %s94 = sadd.s32 %s93, 1
      %p97 = scmp.eq.s32.totalorder %s17, 1
      %p98 = scmp.ne.s32.totalorder %s93, %s95
      %p99 = scmp.eq.s32.totalorder %s17, 0
      %p100 = por %p98, %p99
      %p101 = scmp.ne.s32.totalorder %s93, %s95
      %p102 = scmp.eq.s32.totalorder %s22, 1
      %p103 = por %p101, %p102
      %p104 = scmp.ne.s32.totalorder %s95, %s96
      %p105 = scmp.eq.s32.totalorder %s22, 0
      %p106 = por %p104, %p105
      %p107 = scmp.ne.s32.totalorder %s95, %s96
      %p108 = scmp.eq.s32.totalorder %s23, 1
      %p109 = por %p107, %p108
      %p111 = scmp.ne.s32.totalorder %s96, %s110
      %p112 = scmp.eq.s32.totalorder %s23, 0
      %p113 = por %p111, %p112
      %s115 = sadd.s32 %s114, 1
      %p118 = scmp.eq.s32.totalorder %s17, 1
      %p119 = scmp.ne.s32.totalorder %s114, %s116
      %p120 = scmp.eq.s32.totalorder %s17, 0
      %p121 = por %p119, %p120
      %p122 = scmp.ne.s32.totalorder %s114, %s116
      %p123 = scmp.eq.s32.totalorder %s22, 1
      %p124 = por %p122, %p123
      %p125 = scmp.ne.s32.totalorder %s116, %s117
      %p126 = scmp.eq.s32.totalorder %s22, 0
      %p127 = por %p125, %p126
      %p128 = scmp.ne.s32.totalorder %s116, %s117
      %p129 = scmp.eq.s32.totalorder %s23, 1
      %p130 = por %p128, %p129
      %p132 = scmp.ne.s32.totalorder %s117, %s131
      %p133 = scmp.eq.s32.totalorder %s23, 0
      %p134 = por %p132, %p133
      %s136 = sadd.s32 %s135, 1
      %p139 = scmp.eq.s32.totalorder %s17, 1
      %p140 = scmp.ne.s32.totalorder %s135, %s137
      %p141 = scmp.eq.s32.totalorder %s17, 0
      %p142 = por %p140, %p141
      %p143 = scmp.ne.s32.totalorder %s135, %s137
      %p144 = scmp.eq.s32.totalorder %s22, 1
      %p145 = por %p143, %p144
      %p146 = scmp.ne.s32.totalorder %s137, %s138
      %p147 = scmp.eq.s32.totalorder %s22, 0
      %p148 = por %p146, %p147
      %p149 = scmp.ne.s32.totalorder %s137, %s138
      %p150 = scmp.eq.s32.totalorder %s23, 1
      %p151 = por %p149, %p150
      %p153 = scmp.ne.s32.totalorder %s138, %s152
      %p154 = scmp.eq.s32.totalorder %s23, 0
      %p155 = por %p153, %p154
      %s157 = sadd.s32 %s156, 1
      %p160 = scmp.eq.s32.totalorder %s17, 1
      %p161 = scmp.ne.s32.totalorder %s156, %s158
      %p162 = scmp.eq.s32.totalorder %s17, 0
      %p163 = por %p161, %p162
      %p164 = scmp.ne.s32.totalorder %s156, %s158
      %p165 = scmp.eq.s32.totalorder %s22, 1
      %p166 = por %p164, %p165
      %p167 = scmp.ne.s32.totalorder %s158, %s159
      %p168 = scmp.eq.s32.totalorder %s22, 0
      %p169 = por %p167, %p168
      %p170 = scmp.ne.s32.totalorder %s158, %s159
      %p171 = scmp.eq.s32.totalorder %s23, 1
      %p172 = por %p170, %p171
      %p174 = scmp.ne.s32.totalorder %s159, %s173
      %p175 = scmp.eq.s32.totalorder %s23, 0
      %p176 = por %p174, %p175
      %s177 = ssub.s32 %s17, %s24
      %p178 = scmp.eq.s32.totalorder %s177, 0
      %s180 = sadd.s32 %s179, 1
      %s181 = scalar_select %p178, %s179, %s180
      %p184 = pneg %p178
      %p185 = scmp.eq.s32.totalorder %s17, 1
      %p186 = por %p184, %p185
      %p187 = scmp.ne.s32.totalorder %s179, %s182
      %p188 = scmp.eq.s32.totalorder %s17, 0
      %p189 = por %p187, %p188
      %p190 = scmp.ne.s32.totalorder %s179, %s182
      %p191 = scmp.eq.s32.totalorder %s22, 1
      %p192 = por %p190, %p191
      %p193 = scmp.ne.s32.totalorder %s182, %s183
      %p194 = scmp.eq.s32.totalorder %s22, 0
      %p195 = por %p193, %p194
      %p196 = scmp.ne.s32.totalorder %s182, %s183
      %p197 = scmp.eq.s32.totalorder %s23, 1
      %p198 = por %p196, %p197
      %p200 = scmp.ne.s32.totalorder %s183, %s199
      %p201 = scmp.eq.s32.totalorder %s23, 0
      %p202 = por %p200, %p201
      %p203 = scmp.le.s32.totalorder 1, %s17
      %p204 = scmp.lt.s32.totalorder %s17, 3
      %p205 = pnand %p203, %p204
      %p206 = pneg %p205
      // Predicated region
      $region9: #{tpu_custom_call.1} parent=5 // pred_check
        _
      $region10: #{tpu_custom_call.1} parent=5 // pred_check_branch
        %208 = sbr.rel (%p205) target = $region12
      $region11: #{tpu_custom_call.1} parent=5 // pred_region
        %s209 = ssub.s32 %s17, 1
        // Predicated region
        $region13: #{tpu_custom_call.1} parent=11 // pred_check
          %p210 = pneg %p64
        $region14: #{tpu_custom_call.1} parent=11 // pred_check_branch
          %212 = sbr.rel (%p210) target = $region16
        $region15: #{tpu_custom_call.1} parent=11 // pred_region
          %214 = vsyncadd [#allocation3], 0
          %s215 = sshll.u32 %s1, 4
          %s216 = int_to_ptr.hbm [resolvable:$true] %s215
          %s217 = sshll.u32 [#allocation2], 4
          %s218 = int_to_ptr.vmem [resolvable:$true] %s217
          %223 = dma.hbm_to_vmem [thread:$0]  %s216, 1024, %s218, [#allocation3], 128, 128, 8
        $region16: #{tpu_custom_call.1} parent=11 // pred_fallthru
          _
        // Predicated region
        $region17: #{tpu_custom_call.1} parent=11 // pred_check
          %p224 = pneg %p85
        $region18: #{tpu_custom_call.1} parent=11 // pred_check_branch
          %226 = sbr.rel (%p224) target = $region20
        $region19: #{tpu_custom_call.1} parent=11 // pred_region
          _
        $region20: #{tpu_custom_call.1} parent=11 // pred_fallthru
          _
        // Predicated region
        $region21: #{tpu_custom_call.1} parent=11 // pred_check
          %p227 = pneg %p106
        $region22: #{tpu_custom_call.1} parent=11 // pred_check_branch
          %229 = sbr.rel (%p227) target = $region24
        $region23: #{tpu_custom_call.1} parent=11 // pred_region
          _
        $region24: #{tpu_custom_call.1} parent=11 // pred_fallthru
          _
        // Predicated region
        $region25: #{tpu_custom_call.1} parent=11 // pred_check
          %p230 = pneg %p127
        $region26: #{tpu_custom_call.1} parent=11 // pred_check_branch
          %232 = sbr.rel (%p230) target = $region28
        $region27: #{tpu_custom_call.1} parent=11 // pred_region
          _
        $region28: #{tpu_custom_call.1} parent=11 // pred_fallthru
          _
        // Predicated region
        $region29: #{tpu_custom_call.1} parent=11 // pred_check
          %p233 = pneg %p148
        $region30: #{tpu_custom_call.1} parent=11 // pred_check_branch
          %235 = sbr.rel (%p233) target = $region32
        $region31: #{tpu_custom_call.1} parent=11 // pred_region
          _
        $region32: #{tpu_custom_call.1} parent=11 // pred_fallthru
          _
        // Predicated region
        $region33: #{tpu_custom_call.1} parent=11 // pred_check
          %p236 = pneg %p169
        $region34: #{tpu_custom_call.1} parent=11 // pred_check_branch
          %238 = sbr.rel (%p236) target = $region36
        $region35: #{tpu_custom_call.1} parent=11 // pred_region
          _
        $region36: #{tpu_custom_call.1} parent=11 // pred_fallthru
          _
      $region12: #{tpu_custom_call.1} parent=5 // pred_fallthru
        _
      %p239 = scmp.lt.s32.totalorder %s17, 2
      // Predicated region
      $region37: #{tpu_custom_call.1} parent=5 // pred_check
        %p240 = pneg %p239
      $region38: #{tpu_custom_call.1} parent=5 // pred_check_branch
        %242 = sbr.rel (%p240) target = $region40
      $region39: #{tpu_custom_call.1} parent=5 // pred_region
        // Predicated region
        $region41: #{tpu_custom_call.1} parent=39 // pred_check
          %p243 = pneg %p37
        $region42: #{tpu_custom_call.1} parent=39 // pred_check_branch
          %245 = sbr.rel (%p243) target = $region44
        $region43: #{tpu_custom_call.1} parent=39 // pred_region
          %p246 = scmp.lt.s32.totalorder %s17, 1
          %s247 = scalar_select %p246, %s17, 1
          %s248 = smul.addr %s247, 2
          %s249 = scalar_lea.vmem %s0, %s248
        $region44: #{tpu_custom_call.1} parent=39 // pred_fallthru
          _
      $region40: #{tpu_custom_call.1} parent=5 // pred_fallthru
        _
      %p250 = scmp.le.s32.totalorder 1, %s17
      %p251 = scmp.lt.s32.totalorder %s17, 3
      %p252 = pnand %p250, %p251
      %p253 = pneg %p252
      // Predicated region
      $region45: #{tpu_custom_call.1} parent=5 // pred_check
        _
      $region46: #{tpu_custom_call.1} parent=5 // pred_check_branch
        %255 = sbr.rel (%p252) target = $region48
      $region47: #{tpu_custom_call.1} parent=5 // pred_region
        %s256 = ssub.s32 %s17, 1
        // Predicated region
        $region49: #{tpu_custom_call.1} parent=47 // pred_check
          %p257 = pneg %p64
        $region50: #{tpu_custom_call.1} parent=47 // pred_check_branch
          %259 = sbr.rel (%p257) target = $region52
        $region51: #{tpu_custom_call.1} parent=47 // pred_region
          %261 = dma.done [#allocation3], 1024
        $region52: #{tpu_custom_call.1} parent=47 // pred_fallthru
          _
        %p262 = scmp.lt.s32.totalorder %s22, 1
        %s263 = scalar_select %p262, %s22, 1
        %s264 = smul.addr %s263, 2
        %s265 = scalar_lea.vmem %s0, %s264
        %p266 = pneg %p43
        %p267 = pneg %p40
        %p268 = pneg %p64
        %p269 = pneg %p61
        %p270 = pneg %p85
        %p271 = pneg %p82
        %p272 = pneg %p106
        %p273 = pneg %p103
        %p274 = pneg %p127
        %p275 = pneg %p124
        %p276 = pneg %p148
        %p277 = pneg %p145
        %p278 = pneg %p169
        %p279 = pneg %p166
        %p280 = pneg %p195
        %p281 = pneg %p192
        %s282 = sand.u32 %s182, 1
        %s283 = scalar_lea.sflag [#allocation4], %s282
        %s284 = sand.u32 %s182, 1
        %s285 = smul.addr %s284, 8
        %s286 = scalar_lea.vmem [#allocation5], %s285
        %p287 = scmp.lt.s32.totalorder %s22, 1
        %s288 = scalar_select %p287, %s22, 1
        %s289 = smul.addr %s288, 2
        %s290 = scalar_lea.vmem %s0, %s289
        %v292 = vld [vmem:[%s290] sm:$0x3]
        %v293 = vld [vmem:[#allocation2] sm:$0xff]
        %v294 = vld [vmem:[#allocation2 + $0x8] sm:$0xff]
        %v295 = vld [vmem:[#allocation2 + $0x10] sm:$0xff]
        %v296 = vld [vmem:[#allocation2 + $0x18] sm:$0xff]
        %v297 = vld [vmem:[#allocation2 + $0x20] sm:$0xff]
        %v298 = vld [vmem:[#allocation2 + $0x28] sm:$0xff]
        %v299 = vld [vmem:[#allocation2 + $0x30] sm:$0xff]
        %v300 = vld [vmem:[#allocation2 + $0x38] sm:$0xff]
        %v309 = vunpack.c.l.b16 %v293
        %v310 = vunpack.c.h.b16 %v293
        %v311 = vunpack.c.l.b16 %v294
        %v312 = vunpack.c.h.b16 %v294
        %v313 = vunpack.c.l.b16 %v295
        %v314 = vunpack.c.h.b16 %v295
        %v315 = vunpack.c.l.b16 %v296
        %v316 = vunpack.c.h.b16 %v296
        %v317 = vunpack.c.l.b16 %v297
        %v318 = vunpack.c.h.b16 %v297
        %v319 = vunpack.c.l.b16 %v298
        %v320 = vunpack.c.h.b16 %v298
        %v321 = vunpack.c.l.b16 %v299
        %v322 = vunpack.c.h.b16 %v299
        %v323 = vunpack.c.l.b16 %v300
        %v324 = vunpack.c.h.b16 %v300
        %v325 = vpack.c.b16 %v311, %v309
        %v326 = vpack.c.b16 %v312, %v310
        %v327 = vpack.c.b16 %v315, %v313
        %v328 = vpack.c.b16 %v316, %v314
        %v329 = vpack.c.b16 %v319, %v317
        %v330 = vpack.c.b16 %v320, %v318
        %v331 = vpack.c.b16 %v323, %v321
        %v332 = vpack.c.b16 %v324, %v322
        %vm341 = vcmask 523264
        %v343 = vsel %vm341, %v292, 0
        %345 = vmatpush.bf16.msra.mxu0 0
        %346 = vmatpush.bf16.msra.mxu0 0
        %347 = vmatpush.bf16.msra.mxu0 0
        %348 = vmatpush.bf16.msra.mxu0 0
        %349 = vmatpush.bf16.msra.mxu0 %v331
        %350 = vmatpush.bf16.msra.mxu0 %v329
        %351 = vmatpush.bf16.msra.mxu0 %v327
        %352 = vmatpush.bf16.msra.mxu0 %v325
        %353 = vmatmul.bf16.gmra.mxu0 %v343
        %v354 = vpop.f32.mrf.mxu0
        %v355 = vadd.f32 0.0, %v354
        %v356 = vpop.f32.mrf.mxu0
        %357 = vdwg.mxu0
        %358 = vmatpush.bf16.msra.mxu0 0
        %359 = vmatpush.bf16.msra.mxu0 0
        %360 = vmatpush.bf16.msra.mxu0 0
        %361 = vmatpush.bf16.msra.mxu0 0
        %362 = vmatpush.bf16.msra.mxu0 %v332
        %363 = vmatpush.bf16.msra.mxu0 %v330
        %364 = vmatpush.bf16.msra.mxu0 %v328
        %365 = vmatpush.bf16.msra.mxu0 %v326
        %366 = vmatmul.bf16.gmra.mxu0 %v343
        %v367 = vpop.f32.mrf.mxu0
        %v368 = vadd.f32 0.0, %v367
        %v369 = vpop.f32.mrf.mxu0
        %370 = vdwg.mxu0
        %371 = vrot.lane.b32.xlu0 %v355, 17
        %v372 = vpop.permute.xlu0 %371
        %373 = vrot.lane.b32.xlu0 %v368, 17
        %v374 = vpop.permute.xlu0 %373
        %v375 = vlaneseq
        %v376 = vand.u32 %v375, 127
        %vm377 = vcmp.lt.s32.totalorder %v376, 17
        %v378 = vsel %vm377, %v372, %v374
        %v379 = vsel %vm377, %v374, %v372
        %v380 = vld [vmem:[%s2] ss:$8 sm:$0x3]
        %v382 = vperm.slane %v380, 0
        %v383 = vperm.slane %v380, 1
        %v386 = vmul.f32 %v379, %v382
        %v387 = vmul.f32 %v378, %v383
        %v388 = vld [vmem:[%s3] sm:$0x3]
        %v389 = vpack.c.bf16 %v386, %v386
        %v390 = vpack.c.bf16 %v387, %v387
        %391 = vrot.lane.b32.xlu0 %v355, 16
        %v392 = vpop.permute.xlu0 %391
        %393 = vrot.lane.b32.xlu0 %v368, 16
        %v394 = vpop.permute.xlu0 %393
        %vm395 = vcmp.lt.s32.totalorder %v376, 16
        %v396 = vsel %vm395, %v392, %v394
        %v397 = vsel %vm395, %v394, %v392
        %s398 = scalar_lea.vmem %s2, 1
        %v399 = vld [vmem:[%s398] ss:$8 sm:$0x3]
        %v401 = vperm.slane %v399, 0
        %v402 = vperm.slane %v399, 1
        %v405 = vmul.f32 %v397, %v401
        %v406 = vmul.f32 %v396, %v402
        %s407 = scalar_lea.vmem %s3, 2
        %v408 = vld [vmem:[%s407] sm:$0x3]
        %v409 = vpack.c.bf16 %v405, %v405
        %v410 = vpack.c.bf16 %v406, %v406
        %vm411 = vcmask 31744
        %v413 = vsel %vm411, %v408, 0
        %vm415 = vcmask 1041408
        %v417 = vsel %vm415, %v409, 0
        %v420 = vsel %vm415, %v410, 0
        %422 = vmatpush.bf16.msra.mxu0 0
        %423 = vmatpush.bf16.msra.mxu0 0
        %424 = vmatpush.bf16.msra.mxu0 0
        %425 = vmatpush.bf16.msra.mxu0 0
        %426 = vmatpush.bf16.msra.mxu0 0
        %427 = vmatpush.bf16.msra.mxu0 0
        %428 = vmatpush.bf16.msra.mxu0 0
        %429 = vmatpush.bf16.msra.mxu0 %v417
        %430 = vmatmul.bf16.gmra.mxu0 %v413
        %v431 = vpop.f32.mrf.mxu0
        %v432 = vadd.f32 0.0, %v431
        %v433 = vpop.f32.mrf.mxu0
        %434 = vdwg.mxu0
        %435 = vmatpush.bf16.msra.mxu0 0
        %436 = vmatpush.bf16.msra.mxu0 0
        %437 = vmatpush.bf16.msra.mxu0 0
        %438 = vmatpush.bf16.msra.mxu0 0
        %439 = vmatpush.bf16.msra.mxu0 0
        %440 = vmatpush.bf16.msra.mxu0 0
        %441 = vmatpush.bf16.msra.mxu0 0
        %442 = vmatpush.bf16.msra.mxu0 %v420
        %443 = vmatmul.bf16.gmra.mxu0 %v413
        %v444 = vpop.f32.mrf.mxu0
        %v445 = vadd.f32 0.0, %v444
        %v446 = vpop.f32.mrf.mxu0
        %447 = vdwg.mxu0
        %v449 = vsel %vm411, %v388, 0
        %v452 = vsel %vm415, %v389, 0
        %v455 = vsel %vm415, %v390, 0
        %457 = vmatpush.bf16.msra.mxu0 0
        %458 = vmatpush.bf16.msra.mxu0 0
        %459 = vmatpush.bf16.msra.mxu0 0
        %460 = vmatpush.bf16.msra.mxu0 0
        %461 = vmatpush.bf16.msra.mxu0 0
        %462 = vmatpush.bf16.msra.mxu0 0
        %463 = vmatpush.bf16.msra.mxu0 0
        %464 = vmatpush.bf16.msra.mxu0 %v452
        %465 = vmatmul.bf16.gmra.mxu0 %v449
        %v466 = vpop.f32.mrf.mxu0
        %v467 = vadd.f32 %v432, %v466
        %v468 = vpop.f32.mrf.mxu0
        %469 = vdwg.mxu0
        %470 = vmatpush.bf16.msra.mxu0 0
        %471 = vmatpush.bf16.msra.mxu0 0
        %472 = vmatpush.bf16.msra.mxu0 0
        %473 = vmatpush.bf16.msra.mxu0 0
        %474 = vmatpush.bf16.msra.mxu0 0
        %475 = vmatpush.bf16.msra.mxu0 0
        %476 = vmatpush.bf16.msra.mxu0 0
        %477 = vmatpush.bf16.msra.mxu0 %v455
        %478 = vmatmul.bf16.gmra.mxu0 %v449
        %v479 = vpop.f32.mrf.mxu0
        %v480 = vadd.f32 %v445, %v479
        %v481 = vpop.f32.mrf.mxu0
        %482 = vdwg.mxu0
        %483 = vrot.lane.b32.xlu0 %v355, 15
        %v484 = vpop.permute.xlu0 %483
        %485 = vrot.lane.b32.xlu0 %v368, 15
        %v486 = vpop.permute.xlu0 %485
        %vm487 = vcmp.lt.s32.totalorder %v376, 15
        %v488 = vsel %vm487, %v484, %v486
        %v489 = vsel %vm487, %v486, %v484
        %s490 = scalar_lea.vmem %s2, 2
        %v491 = vld [vmem:[%s490] ss:$8 sm:$0x3]
        %v493 = vperm.slane %v491, 0
        %v494 = vperm.slane %v491, 1
        %v497 = vmul.f32 %v489, %v493
        %v498 = vmul.f32 %v488, %v494
        %s499 = scalar_lea.vmem %s3, 4
        %v500 = vld [vmem:[%s499] sm:$0x3]
        %v501 = vpack.c.bf16 %v497, %v497
        %v502 = vpack.c.bf16 %v498, %v498
        %v504 = vsel %vm411, %v500, 0
        %v507 = vsel %vm415, %v501, 0
        %v510 = vsel %vm415, %v502, 0
        %512 = vmatpush.bf16.msra.mxu0 0
        %513 = vmatpush.bf16.msra.mxu0 0
        %514 = vmatpush.bf16.msra.mxu0 0
        %515 = vmatpush.bf16.msra.mxu0 0
        %516 = vmatpush.bf16.msra.mxu0 0
        %517 = vmatpush.bf16.msra.mxu0 0
        %518 = vmatpush.bf16.msra.mxu0 0
        %519 = vmatpush.bf16.msra.mxu0 %v507
        %520 = vmatmul.bf16.gmra.mxu0 %v504
        %v521 = vpop.f32.mrf.mxu0
        %v522 = vadd.f32 0.0, %v521
        %v523 = vpop.f32.mrf.mxu0
        %524 = vdwg.mxu0
        %525 = vmatpush.bf16.msra.mxu0 0
        %526 = vmatpush.bf16.msra.mxu0 0
        %527 = vmatpush.bf16.msra.mxu0 0
        %528 = vmatpush.bf16.msra.mxu0 0
        %529 = vmatpush.bf16.msra.mxu0 0
        %530 = vmatpush.bf16.msra.mxu0 0
        %531 = vmatpush.bf16.msra.mxu0 0
        %532 = vmatpush.bf16.msra.mxu0 %v510
        %533 = vmatmul.bf16.gmra.mxu0 %v504
        %v534 = vpop.f32.mrf.mxu0
        %v535 = vadd.f32 0.0, %v534
        %v536 = vpop.f32.mrf.mxu0
        %537 = vdwg.mxu0
        %v538 = vadd.f32 %v467, %v522
        %v539 = vadd.f32 %v480, %v535
        %540 = vrot.lane.b32.xlu0 %v355, 1
        %v541 = vpop.permute.xlu0 %540
        %542 = vrot.lane.b32.xlu0 %v368, 1
        %v543 = vpop.permute.xlu0 %542
        %vm544 = vcmp.lt.s32.totalorder %v376, 1
        %v545 = vsel %vm544, %v541, %v543
        %v546 = vsel %vm544, %v543, %v541
        %s547 = scalar_lea.vmem %s2, 3
        %v548 = vld [vmem:[%s547] ss:$8 sm:$0x3]
        %v550 = vperm.slane %v548, 0
        %v551 = vperm.slane %v548, 1
        %v554 = vmul.f32 %v546, %v550
        %v555 = vmul.f32 %v545, %v551
        %s556 = scalar_lea.vmem %s3, 6
        %v557 = vld [vmem:[%s556] sm:$0x3]
        %v558 = vpack.c.bf16 %v554, %v554
        %v559 = vpack.c.bf16 %v555, %v555
        %v561 = vsel %vm411, %v557, 0
        %v564 = vsel %vm415, %v558, 0
        %v567 = vsel %vm415, %v559, 0
        %569 = vmatpush.bf16.msra.mxu0 0
        %570 = vmatpush.bf16.msra.mxu0 0
        %571 = vmatpush.bf16.msra.mxu0 0
        %572 = vmatpush.bf16.msra.mxu0 0
        %573 = vmatpush.bf16.msra.mxu0 0
        %574 = vmatpush.bf16.msra.mxu0 0
        %575 = vmatpush.bf16.msra.mxu0 0
        %576 = vmatpush.bf16.msra.mxu0 %v564
        %577 = vmatmul.bf16.gmra.mxu0 %v561
        %v578 = vpop.f32.mrf.mxu0
        %v579 = vadd.f32 0.0, %v578
        %v580 = vpop.f32.mrf.mxu0
        %581 = vdwg.mxu0
        %582 = vmatpush.bf16.msra.mxu0 0
        %583 = vmatpush.bf16.msra.mxu0 0
        %584 = vmatpush.bf16.msra.mxu0 0
        %585 = vmatpush.bf16.msra.mxu0 0
        %586 = vmatpush.bf16.msra.mxu0 0
        %587 = vmatpush.bf16.msra.mxu0 0
        %588 = vmatpush.bf16.msra.mxu0 0
        %589 = vmatpush.bf16.msra.mxu0 %v567
        %590 = vmatmul.bf16.gmra.mxu0 %v561
        %v591 = vpop.f32.mrf.mxu0
        %v592 = vadd.f32 0.0, %v591
        %v593 = vpop.f32.mrf.mxu0
        %594 = vdwg.mxu0
        %v595 = vadd.f32 %v538, %v579
        %v596 = vadd.f32 %v539, %v592
        %s597 = scalar_lea.vmem %s3, 8
        %v598 = vld [vmem:[%s597] sm:$0x3]
        %v599 = vpack.c.bf16 %v355, %v355
        %v600 = vpack.c.bf16 %v368, %v368
        %v602 = vsel %vm411, %v598, 0
        %v605 = vsel %vm415, %v599, 0
        %v608 = vsel %vm415, %v600, 0
        %610 = vmatpush.bf16.msra.mxu0 0
        %611 = vmatpush.bf16.msra.mxu0 0
        %612 = vmatpush.bf16.msra.mxu0 0
        %613 = vmatpush.bf16.msra.mxu0 0
        %614 = vmatpush.bf16.msra.mxu0 0
        %615 = vmatpush.bf16.msra.mxu0 0
        %616 = vmatpush.bf16.msra.mxu0 0
        %617 = vmatpush.bf16.msra.mxu0 %v605
        %618 = vmatmul.bf16.gmra.mxu0 %v602
        %v619 = vpop.f32.mrf.mxu0
        %v620 = vadd.f32 0.0, %v619
        %v621 = vpop.f32.mrf.mxu0
        %622 = vdwg.mxu0
        %623 = vmatpush.bf16.msra.mxu0 0
        %624 = vmatpush.bf16.msra.mxu0 0
        %625 = vmatpush.bf16.msra.mxu0 0
        %626 = vmatpush.bf16.msra.mxu0 0
        %627 = vmatpush.bf16.msra.mxu0 0
        %628 = vmatpush.bf16.msra.mxu0 0
        %629 = vmatpush.bf16.msra.mxu0 0
        %630 = vmatpush.bf16.msra.mxu0 %v608
        %631 = vmatmul.bf16.gmra.mxu0 %v602
        %v632 = vpop.f32.mrf.mxu0
        %v633 = vadd.f32 0.0, %v632
        %v634 = vpop.f32.mrf.mxu0
        %635 = vdwg.mxu0
        %v636 = vadd.f32 %v595, %v620
        %v637 = vadd.f32 %v596, %v633
        %638 = vrot.lane.b32.xlu0 %v355, 127
        %v639 = vpop.permute.xlu0 %638
        %640 = vrot.lane.b32.xlu0 %v368, 127
        %v641 = vpop.permute.xlu0 %640
        %vm642 = vcmp.lt.s32.totalorder %v376, 127
        %v643 = vsel %vm642, %v639, %v641
        %v644 = vsel %vm642, %v641, %v639
        %s645 = scalar_lea.vmem %s2, 5
        %v646 = vld [vmem:[%s645] ss:$8 sm:$0x3]
        %v648 = vperm.slane %v646, 0
        %v649 = vperm.slane %v646, 1
        %v652 = vmul.f32 %v643, %v648
        %v653 = vmul.f32 %v644, %v649
        %s654 = scalar_lea.vmem %s3, 10
        %v655 = vld [vmem:[%s654] sm:$0x3]
        %v656 = vpack.c.bf16 %v652, %v652
        %v657 = vpack.c.bf16 %v653, %v653
        %v659 = vsel %vm411, %v655, 0
        %v662 = vsel %vm415, %v656, 0
        %v665 = vsel %vm415, %v657, 0
        %667 = vmatpush.bf16.msra.mxu0 0
        %668 = vmatpush.bf16.msra.mxu0 0
        %669 = vmatpush.bf16.msra.mxu0 0
        %670 = vmatpush.bf16.msra.mxu0 0
        %671 = vmatpush.bf16.msra.mxu0 0
        %672 = vmatpush.bf16.msra.mxu0 0
        %673 = vmatpush.bf16.msra.mxu0 0
        %674 = vmatpush.bf16.msra.mxu0 %v662
        %675 = vmatmul.bf16.gmra.mxu0 %v659
        %v676 = vpop.f32.mrf.mxu0
        %v677 = vadd.f32 0.0, %v676
        %v678 = vpop.f32.mrf.mxu0
        %679 = vdwg.mxu0
        %680 = vmatpush.bf16.msra.mxu0 0
        %681 = vmatpush.bf16.msra.mxu0 0
        %682 = vmatpush.bf16.msra.mxu0 0
        %683 = vmatpush.bf16.msra.mxu0 0
        %684 = vmatpush.bf16.msra.mxu0 0
        %685 = vmatpush.bf16.msra.mxu0 0
        %686 = vmatpush.bf16.msra.mxu0 0
        %687 = vmatpush.bf16.msra.mxu0 %v665
        %688 = vmatmul.bf16.gmra.mxu0 %v659
        %v689 = vpop.f32.mrf.mxu0
        %v690 = vadd.f32 0.0, %v689
        %v691 = vpop.f32.mrf.mxu0
        %692 = vdwg.mxu0
        %v693 = vadd.f32 %v636, %v677
        %v694 = vadd.f32 %v637, %v690
        %695 = vrot.lane.b32.xlu0 %v355, 113
        %v696 = vpop.permute.xlu0 %695
        %697 = vrot.lane.b32.xlu0 %v368, 113
        %v698 = vpop.permute.xlu0 %697
        %vm699 = vcmp.lt.s32.totalorder %v376, 113
        %v700 = vsel %vm699, %v696, %v698
        %v701 = vsel %vm699, %v698, %v696
        %s702 = scalar_lea.vmem %s2, 6
        %v703 = vld [vmem:[%s702] ss:$8 sm:$0x3]
        %v705 = vperm.slane %v703, 0
        %v706 = vperm.slane %v703, 1
        %v709 = vmul.f32 %v700, %v705
        %v710 = vmul.f32 %v701, %v706
        %s711 = scalar_lea.vmem %s3, 12
        %v712 = vld [vmem:[%s711] sm:$0x3]
        %v713 = vpack.c.bf16 %v709, %v709
        %v714 = vpack.c.bf16 %v710, %v710
        %v716 = vsel %vm411, %v712, 0
        %v719 = vsel %vm415, %v713, 0
        %v722 = vsel %vm415, %v714, 0
        %724 = vmatpush.bf16.msra.mxu0 0
        %725 = vmatpush.bf16.msra.mxu0 0
        %726 = vmatpush.bf16.msra.mxu0 0
        %727 = vmatpush.bf16.msra.mxu0 0
        %728 = vmatpush.bf16.msra.mxu0 0
        %729 = vmatpush.bf16.msra.mxu0 0
        %730 = vmatpush.bf16.msra.mxu0 0
        %731 = vmatpush.bf16.msra.mxu0 %v719
        %732 = vmatmul.bf16.gmra.mxu0 %v716
        %v733 = vpop.f32.mrf.mxu0
        %v734 = vadd.f32 0.0, %v733
        %v735 = vpop.f32.mrf.mxu0
        %736 = vdwg.mxu0
        %737 = vmatpush.bf16.msra.mxu0 0
        %738 = vmatpush.bf16.msra.mxu0 0
        %739 = vmatpush.bf16.msra.mxu0 0
        %740 = vmatpush.bf16.msra.mxu0 0
        %741 = vmatpush.bf16.msra.mxu0 0
        %742 = vmatpush.bf16.msra.mxu0 0
        %743 = vmatpush.bf16.msra.mxu0 0
        %744 = vmatpush.bf16.msra.mxu0 %v722
        %745 = vmatmul.bf16.gmra.mxu0 %v716
        %v746 = vpop.f32.mrf.mxu0
        %v747 = vadd.f32 0.0, %v746
        %v748 = vpop.f32.mrf.mxu0
        %749 = vdwg.mxu0
        %v750 = vadd.f32 %v693, %v734
        %v751 = vadd.f32 %v694, %v747
        %752 = vrot.lane.b32.xlu0 %v355, 112
        %v753 = vpop.permute.xlu0 %752
        %754 = vrot.lane.b32.xlu0 %v368, 112
        %v755 = vpop.permute.xlu0 %754
        %vm756 = vcmp.lt.s32.totalorder %v376, 112
        %v757 = vsel %vm756, %v753, %v755
        %v758 = vsel %vm756, %v755, %v753
        %s759 = scalar_lea.vmem %s2, 7
        %v760 = vld [vmem:[%s759] ss:$8 sm:$0x3]
        %v762 = vperm.slane %v760, 0
        %v763 = vperm.slane %v760, 1
        %v766 = vmul.f32 %v757, %v762
        %v767 = vmul.f32 %v758, %v763
        %s768 = scalar_lea.vmem %s3, 14
        %v769 = vld [vmem:[%s768] sm:$0x3]
        %v770 = vpack.c.bf16 %v766, %v766
        %v771 = vpack.c.bf16 %v767, %v767
        %v773 = vsel %vm411, %v769, 0
        %v776 = vsel %vm415, %v770, 0
        %v779 = vsel %vm415, %v771, 0
        %781 = vmatpush.bf16.msra.mxu0 0
        %782 = vmatpush.bf16.msra.mxu0 0
        %783 = vmatpush.bf16.msra.mxu0 0
        %784 = vmatpush.bf16.msra.mxu0 0
        %785 = vmatpush.bf16.msra.mxu0 0
        %786 = vmatpush.bf16.msra.mxu0 0
        %787 = vmatpush.bf16.msra.mxu0 0
        %788 = vmatpush.bf16.msra.mxu0 %v776
        %789 = vmatmul.bf16.gmra.mxu0 %v773
        %v790 = vpop.f32.mrf.mxu0
        %v791 = vadd.f32 0.0, %v790
        %v792 = vpop.f32.mrf.mxu0
        %793 = vdwg.mxu0
        %794 = vmatpush.bf16.msra.mxu0 0
        %795 = vmatpush.bf16.msra.mxu0 0
        %796 = vmatpush.bf16.msra.mxu0 0
        %797 = vmatpush.bf16.msra.mxu0 0
        %798 = vmatpush.bf16.msra.mxu0 0
        %799 = vmatpush.bf16.msra.mxu0 0
        %800 = vmatpush.bf16.msra.mxu0 0
        %801 = vmatpush.bf16.msra.mxu0 %v779
        %802 = vmatmul.bf16.gmra.mxu0 %v773
        %v803 = vpop.f32.mrf.mxu0
        %v804 = vadd.f32 0.0, %v803
        %v805 = vpop.f32.mrf.mxu0
        %806 = vdwg.mxu0
        %v807 = vadd.f32 %v750, %v791
        %v808 = vadd.f32 %v751, %v804
        %809 = vrot.lane.b32.xlu0 %v355, 111
        %v810 = vpop.permute.xlu0 %809
        %811 = vrot.lane.b32.xlu0 %v368, 111
        %v812 = vpop.permute.xlu0 %811
        %vm813 = vcmp.lt.s32.totalorder %v376, 111
        %v814 = vsel %vm813, %v810, %v812
        %v815 = vsel %vm813, %v812, %v810
        %s816 = scalar_lea.vmem %s2, 16
        %v817 = vld [vmem:[%s816] ss:$8 sm:$0x3]
        %v819 = vperm.slane %v817, 0
        %v820 = vperm.slane %v817, 1
        %v823 = vmul.f32 %v814, %v819
        %v824 = vmul.f32 %v815, %v820
        %s825 = scalar_lea.vmem %s3, 16
        %v826 = vld [vmem:[%s825] sm:$0x3]
        %v827 = vpack.c.bf16 %v823, %v823
        %v828 = vpack.c.bf16 %v824, %v824
        %v830 = vsel %vm411, %v826, 0
        %v833 = vsel %vm415, %v827, 0
        %v836 = vsel %vm415, %v828, 0
        %838 = vmatpush.bf16.msra.mxu0 0
        %839 = vmatpush.bf16.msra.mxu0 0
        %840 = vmatpush.bf16.msra.mxu0 0
        %841 = vmatpush.bf16.msra.mxu0 0
        %842 = vmatpush.bf16.msra.mxu0 0
        %843 = vmatpush.bf16.msra.mxu0 0
        %844 = vmatpush.bf16.msra.mxu0 0
        %845 = vmatpush.bf16.msra.mxu0 %v833
        %846 = vmatmul.bf16.gmra.mxu0 %v830
        %v847 = vpop.f32.mrf.mxu0
        %v848 = vadd.f32 0.0, %v847
        %v849 = vpop.f32.mrf.mxu0
        %850 = vdwg.mxu0
        %851 = vmatpush.bf16.msra.mxu0 0
        %852 = vmatpush.bf16.msra.mxu0 0
        %853 = vmatpush.bf16.msra.mxu0 0
        %854 = vmatpush.bf16.msra.mxu0 0
        %855 = vmatpush.bf16.msra.mxu0 0
        %856 = vmatpush.bf16.msra.mxu0 0
        %857 = vmatpush.bf16.msra.mxu0 0
        %858 = vmatpush.bf16.msra.mxu0 %v836
        %859 = vmatmul.bf16.gmra.mxu0 %v830
        %v860 = vpop.f32.mrf.mxu0
        %v861 = vadd.f32 0.0, %v860
        %v862 = vpop.f32.mrf.mxu0
        %863 = vdwg.mxu0
        %v864 = vadd.f32 %v807, %v848
        %v865 = vadd.f32 %v808, %v861
        %v866 = vld [vmem:[%s4] sm:$0xf]
        %868 = vset.pattern.permute.xlu0 0
        %869 = vperm.xlu0 %868, %v866
        %v870 = vpop.permute.xlu0 %869
        %v872 = vadd.f32 %v864, %v870
        %v873 = vadd.f32 %v865, %v870
        %v874 = vmax.f32 %v872, 0.0
        %v875 = vmax.f32 %v873, 0.0
        %876 = vrot.lane.b32.xlu0 %v874, 17
        %v877 = vpop.permute.xlu0 %876
        %878 = vrot.lane.b32.xlu0 %v875, 17
        %v879 = vpop.permute.xlu0 %878
        %v880 = vsel %vm377, %v877, %v879
        %v881 = vsel %vm377, %v879, %v877
        %v882 = vmul.f32 %v881, %v382
        %v883 = vmul.f32 %v880, %v383
        %v884 = vld [vmem:[%s5] sm:$0x3]
        %v885 = vpack.c.bf16 %v882, %v882
        %v886 = vpack.c.bf16 %v883, %v883
        %887 = vrot.lane.b32.xlu0 %v874, 16
        %v888 = vpop.permute.xlu0 %887
        %889 = vrot.lane.b32.xlu0 %v875, 16
        %v890 = vpop.permute.xlu0 %889
        %v891 = vsel %vm395, %v888, %v890
        %v892 = vsel %vm395, %v890, %v888
        %v893 = vmul.f32 %v892, %v401
        %v894 = vmul.f32 %v891, %v402
        %s895 = scalar_lea.vmem %s5, 2
        %v896 = vld [vmem:[%s895] sm:$0x3]
        %v897 = vpack.c.bf16 %v893, %v893
        %v898 = vpack.c.bf16 %v894, %v894
        %v900 = vsel %vm411, %v896, 0
        %v903 = vsel %vm415, %v897, 0
        %v906 = vsel %vm415, %v898, 0
        %908 = vmatpush.bf16.msra.mxu0 0
        %909 = vmatpush.bf16.msra.mxu0 0
        %910 = vmatpush.bf16.msra.mxu0 0
        %911 = vmatpush.bf16.msra.mxu0 0
        %912 = vmatpush.bf16.msra.mxu0 0
        %913 = vmatpush.bf16.msra.mxu0 0
        %914 = vmatpush.bf16.msra.mxu0 0
        %915 = vmatpush.bf16.msra.mxu0 %v903
        %916 = vmatmul.bf16.gmra.mxu0 %v900
        %v917 = vpop.f32.mrf.mxu0
        %v918 = vadd.f32 0.0, %v917
        %v919 = vpop.f32.mrf.mxu0
        %920 = vdwg.mxu0
        %921 = vmatpush.bf16.msra.mxu0 0
        %922 = vmatpush.bf16.msra.mxu0 0
        %923 = vmatpush.bf16.msra.mxu0 0
        %924 = vmatpush.bf16.msra.mxu0 0
        %925 = vmatpush.bf16.msra.mxu0 0
        %926 = vmatpush.bf16.msra.mxu0 0
        %927 = vmatpush.bf16.msra.mxu0 0
        %928 = vmatpush.bf16.msra.mxu0 %v906
        %929 = vmatmul.bf16.gmra.mxu0 %v900
        %v930 = vpop.f32.mrf.mxu0
        %v931 = vadd.f32 0.0, %v930
        %v932 = vpop.f32.mrf.mxu0
        %933 = vdwg.mxu0
        %v935 = vsel %vm411, %v884, 0
        %v938 = vsel %vm415, %v885, 0
        %v941 = vsel %vm415, %v886, 0
        %943 = vmatpush.bf16.msra.mxu0 0
        %944 = vmatpush.bf16.msra.mxu0 0
        %945 = vmatpush.bf16.msra.mxu0 0
        %946 = vmatpush.bf16.msra.mxu0 0
        %947 = vmatpush.bf16.msra.mxu0 0
        %948 = vmatpush.bf16.msra.mxu0 0
        %949 = vmatpush.bf16.msra.mxu0 0
        %950 = vmatpush.bf16.msra.mxu0 %v938
        %951 = vmatmul.bf16.gmra.mxu0 %v935
        %v952 = vpop.f32.mrf.mxu0
        %v953 = vadd.f32 %v918, %v952
        %v954 = vpop.f32.mrf.mxu0
        %955 = vdwg.mxu0
        %956 = vmatpush.bf16.msra.mxu0 0
        %957 = vmatpush.bf16.msra.mxu0 0
        %958 = vmatpush.bf16.msra.mxu0 0
        %959 = vmatpush.bf16.msra.mxu0 0
        %960 = vmatpush.bf16.msra.mxu0 0
        %961 = vmatpush.bf16.msra.mxu0 0
        %962 = vmatpush.bf16.msra.mxu0 0
        %963 = vmatpush.bf16.msra.mxu0 %v941
        %964 = vmatmul.bf16.gmra.mxu0 %v935
        %v965 = vpop.f32.mrf.mxu0
        %v966 = vadd.f32 %v931, %v965
        %v967 = vpop.f32.mrf.mxu0
        %968 = vdwg.mxu0
        %969 = vrot.lane.b32.xlu0 %v874, 15
        %v970 = vpop.permute.xlu0 %969
        %971 = vrot.lane.b32.xlu0 %v875, 15
        %v972 = vpop.permute.xlu0 %971
        %v973 = vsel %vm487, %v970, %v972
        %v974 = vsel %vm487, %v972, %v970
        %v975 = vmul.f32 %v974, %v493
        %v976 = vmul.f32 %v973, %v494
        %s977 = scalar_lea.vmem %s5, 4
        %v978 = vld [vmem:[%s977] sm:$0x3]
        %v979 = vpack.c.bf16 %v975, %v975
        %v980 = vpack.c.bf16 %v976, %v976
        %v982 = vsel %vm411, %v978, 0
        %v985 = vsel %vm415, %v979, 0
        %v988 = vsel %vm415, %v980, 0
        %990 = vmatpush.bf16.msra.mxu0 0
        %991 = vmatpush.bf16.msra.mxu0 0
        %992 = vmatpush.bf16.msra.mxu0 0
        %993 = vmatpush.bf16.msra.mxu0 0
        %994 = vmatpush.bf16.msra.mxu0 0
        %995 = vmatpush.bf16.msra.mxu0 0
        %996 = vmatpush.bf16.msra.mxu0 0
        %997 = vmatpush.bf16.msra.mxu0 %v985
        %998 = vmatmul.bf16.gmra.mxu0 %v982
        %v999 = vpop.f32.mrf.mxu0
        %v1000 = vadd.f32 0.0, %v999
        %v1001 = vpop.f32.mrf.mxu0
        %1002 = vdwg.mxu0
        %1003 = vmatpush.bf16.msra.mxu0 0
        %1004 = vmatpush.bf16.msra.mxu0 0
        %1005 = vmatpush.bf16.msra.mxu0 0
        %1006 = vmatpush.bf16.msra.mxu0 0
        %1007 = vmatpush.bf16.msra.mxu0 0
        %1008 = vmatpush.bf16.msra.mxu0 0
        %1009 = vmatpush.bf16.msra.mxu0 0
        %1010 = vmatpush.bf16.msra.mxu0 %v988
        %1011 = vmatmul.bf16.gmra.mxu0 %v982
        %v1012 = vpop.f32.mrf.mxu0
        %v1013 = vadd.f32 0.0, %v1012
        %v1014 = vpop.f32.mrf.mxu0
        %1015 = vdwg.mxu0
        %v1016 = vadd.f32 %v953, %v1000
        %v1017 = vadd.f32 %v966, %v1013
        %1018 = vrot.lane.b32.xlu0 %v874, 1
        %v1019 = vpop.permute.xlu0 %1018
        %1020 = vrot.lane.b32.xlu0 %v875, 1
        %v1021 = vpop.permute.xlu0 %1020
        %v1022 = vsel %vm544, %v1019, %v1021
        %v1023 = vsel %vm544, %v1021, %v1019
        %v1024 = vmul.f32 %v1023, %v550
        %v1025 = vmul.f32 %v1022, %v551
        %s1026 = scalar_lea.vmem %s5, 6
        %v1027 = vld [vmem:[%s1026] sm:$0x3]
        %v1028 = vpack.c.bf16 %v1024, %v1024
        %v1029 = vpack.c.bf16 %v1025, %v1025
        %v1031 = vsel %vm411, %v1027, 0
        %v1034 = vsel %vm415, %v1028, 0
        %v1037 = vsel %vm415, %v1029, 0
        %1039 = vmatpush.bf16.msra.mxu0 0
        %1040 = vmatpush.bf16.msra.mxu0 0
        %1041 = vmatpush.bf16.msra.mxu0 0
        %1042 = vmatpush.bf16.msra.mxu0 0
        %1043 = vmatpush.bf16.msra.mxu0 0
        %1044 = vmatpush.bf16.msra.mxu0 0
        %1045 = vmatpush.bf16.msra.mxu0 0
        %1046 = vmatpush.bf16.msra.mxu0 %v1034
        %1047 = vmatmul.bf16.gmra.mxu0 %v1031
        %v1048 = vpop.f32.mrf.mxu0
        %v1049 = vadd.f32 0.0, %v1048
        %v1050 = vpop.f32.mrf.mxu0
        %1051 = vdwg.mxu0
        %1052 = vmatpush.bf16.msra.mxu0 0
        %1053 = vmatpush.bf16.msra.mxu0 0
        %1054 = vmatpush.bf16.msra.mxu0 0
        %1055 = vmatpush.bf16.msra.mxu0 0
        %1056 = vmatpush.bf16.msra.mxu0 0
        %1057 = vmatpush.bf16.msra.mxu0 0
        %1058 = vmatpush.bf16.msra.mxu0 0
        %1059 = vmatpush.bf16.msra.mxu0 %v1037
        %1060 = vmatmul.bf16.gmra.mxu0 %v1031
        %v1061 = vpop.f32.mrf.mxu0
        %v1062 = vadd.f32 0.0, %v1061
        %v1063 = vpop.f32.mrf.mxu0
        %1064 = vdwg.mxu0
        %v1065 = vadd.f32 %v1016, %v1049
        %v1066 = vadd.f32 %v1017, %v1062
        %s1067 = scalar_lea.vmem %s5, 8
        %v1068 = vld [vmem:[%s1067] sm:$0x3]
        %v1069 = vpack.c.bf16 %v874, %v874
        %v1070 = vpack.c.bf16 %v875, %v875
        %v1072 = vsel %vm411, %v1068, 0
        %v1075 = vsel %vm415, %v1069, 0
        %v1078 = vsel %vm415, %v1070, 0
        %1080 = vmatpush.bf16.msra.mxu0 0
        %1081 = vmatpush.bf16.msra.mxu0 0
        %1082 = vmatpush.bf16.msra.mxu0 0
        %1083 = vmatpush.bf16.msra.mxu0 0
        %1084 = vmatpush.bf16.msra.mxu0 0
        %1085 = vmatpush.bf16.msra.mxu0 0
        %1086 = vmatpush.bf16.msra.mxu0 0
        %1087 = vmatpush.bf16.msra.mxu0 %v1075
        %1088 = vmatmul.bf16.gmra.mxu0 %v1072
        %v1089 = vpop.f32.mrf.mxu0
        %v1090 = vadd.f32 0.0, %v1089
        %v1091 = vpop.f32.mrf.mxu0
        %1092 = vdwg.mxu0
        %1093 = vmatpush.bf16.msra.mxu0 0
        %1094 = vmatpush.bf16.msra.mxu0 0
        %1095 = vmatpush.bf16.msra.mxu0 0
        %1096 = vmatpush.bf16.msra.mxu0 0
        %1097 = vmatpush.bf16.msra.mxu0 0
        %1098 = vmatpush.bf16.msra.mxu0 0
        %1099 = vmatpush.bf16.msra.mxu0 0
        %1100 = vmatpush.bf16.msra.mxu0 %v1078
        %1101 = vmatmul.bf16.gmra.mxu0 %v1072
        %v1102 = vpop.f32.mrf.mxu0
        %v1103 = vadd.f32 0.0, %v1102
        %v1104 = vpop.f32.mrf.mxu0
        %1105 = vdwg.mxu0
        %v1106 = vadd.f32 %v1065, %v1090
        %v1107 = vadd.f32 %v1066, %v1103
        %1108 = vrot.lane.b32.xlu0 %v874, 127
        %v1109 = vpop.permute.xlu0 %1108
        %1110 = vrot.lane.b32.xlu0 %v875, 127
        %v1111 = vpop.permute.xlu0 %1110
        %v1112 = vsel %vm642, %v1109, %v1111
        %v1113 = vsel %vm642, %v1111, %v1109
        %v1114 = vmul.f32 %v1112, %v648
        %v1115 = vmul.f32 %v1113, %v649
        %s1116 = scalar_lea.vmem %s5, 10
        %v1117 = vld [vmem:[%s1116] sm:$0x3]
        %v1118 = vpack.c.bf16 %v1114, %v1114
        %v1119 = vpack.c.bf16 %v1115, %v1115
        %v1121 = vsel %vm411, %v1117, 0
        %v1124 = vsel %vm415, %v1118, 0
        %v1127 = vsel %vm415, %v1119, 0
        %1129 = vmatpush.bf16.msra.mxu0 0
        %1130 = vmatpush.bf16.msra.mxu0 0
        %1131 = vmatpush.bf16.msra.mxu0 0
        %1132 = vmatpush.bf16.msra.mxu0 0
        %1133 = vmatpush.bf16.msra.mxu0 0
        %1134 = vmatpush.bf16.msra.mxu0 0
        %1135 = vmatpush.bf16.msra.mxu0 0
        %1136 = vmatpush.bf16.msra.mxu0 %v1124
        %1137 = vmatmul.bf16.gmra.mxu0 %v1121
        %v1138 = vpop.f32.mrf.mxu0
        %v1139 = vadd.f32 0.0, %v1138
        %v1140 = vpop.f32.mrf.mxu0
        %1141 = vdwg.mxu0
        %1142 = vmatpush.bf16.msra.mxu0 0
        %1143 = vmatpush.bf16.msra.mxu0 0
        %1144 = vmatpush.bf16.msra.mxu0 0
        %1145 = vmatpush.bf16.msra.mxu0 0
        %1146 = vmatpush.bf16.msra.mxu0 0
        %1147 = vmatpush.bf16.msra.mxu0 0
        %1148 = vmatpush.bf16.msra.mxu0 0
        %1149 = vmatpush.bf16.msra.mxu0 %v1127
        %1150 = vmatmul.bf16.gmra.mxu0 %v1121
        %v1151 = vpop.f32.mrf.mxu0
        %v1152 = vadd.f32 0.0, %v1151
        %v1153 = vpop.f32.mrf.mxu0
        %1154 = vdwg.mxu0
        %v1155 = vadd.f32 %v1106, %v1139
        %v1156 = vadd.f32 %v1107, %v1152
        %1157 = vrot.lane.b32.xlu0 %v874, 113
        %v1158 = vpop.permute.xlu0 %1157
        %1159 = vrot.lane.b32.xlu0 %v875, 113
        %v1160 = vpop.permute.xlu0 %1159
        %v1161 = vsel %vm699, %v1158, %v1160
        %v1162 = vsel %vm699, %v1160, %v1158
        %v1163 = vmul.f32 %v1161, %v705
        %v1164 = vmul.f32 %v1162, %v706
        %s1165 = scalar_lea.vmem %s5, 12
        %v1166 = vld [vmem:[%s1165] sm:$0x3]
        %v1167 = vpack.c.bf16 %v1163, %v1163
        %v1168 = vpack.c.bf16 %v1164, %v1164
        %v1170 = vsel %vm411, %v1166, 0
        %v1173 = vsel %vm415, %v1167, 0
        %v1176 = vsel %vm415, %v1168, 0
        %1178 = vmatpush.bf16.msra.mxu0 0
        %1179 = vmatpush.bf16.msra.mxu0 0
        %1180 = vmatpush.bf16.msra.mxu0 0
        %1181 = vmatpush.bf16.msra.mxu0 0
        %1182 = vmatpush.bf16.msra.mxu0 0
        %1183 = vmatpush.bf16.msra.mxu0 0
        %1184 = vmatpush.bf16.msra.mxu0 0
        %1185 = vmatpush.bf16.msra.mxu0 %v1173
        %1186 = vmatmul.bf16.gmra.mxu0 %v1170
        %v1187 = vpop.f32.mrf.mxu0
        %v1188 = vadd.f32 0.0, %v1187
        %v1189 = vpop.f32.mrf.mxu0
        %1190 = vdwg.mxu0
        %1191 = vmatpush.bf16.msra.mxu0 0
        %1192 = vmatpush.bf16.msra.mxu0 0
        %1193 = vmatpush.bf16.msra.mxu0 0
        %1194 = vmatpush.bf16.msra.mxu0 0
        %1195 = vmatpush.bf16.msra.mxu0 0
        %1196 = vmatpush.bf16.msra.mxu0 0
        %1197 = vmatpush.bf16.msra.mxu0 0
        %1198 = vmatpush.bf16.msra.mxu0 %v1176
        %1199 = vmatmul.bf16.gmra.mxu0 %v1170
        %v1200 = vpop.f32.mrf.mxu0
        %v1201 = vadd.f32 0.0, %v1200
        %v1202 = vpop.f32.mrf.mxu0
        %1203 = vdwg.mxu0
        %v1204 = vadd.f32 %v1155, %v1188
        %v1205 = vadd.f32 %v1156, %v1201
        %1206 = vrot.lane.b32.xlu0 %v874, 112
        %v1207 = vpop.permute.xlu0 %1206
        %1208 = vrot.lane.b32.xlu0 %v875, 112
        %v1209 = vpop.permute.xlu0 %1208
        %v1210 = vsel %vm756, %v1207, %v1209
        %v1211 = vsel %vm756, %v1209, %v1207
        %v1212 = vmul.f32 %v1210, %v762
        %v1213 = vmul.f32 %v1211, %v763
        %s1214 = scalar_lea.vmem %s5, 14
        %v1215 = vld [vmem:[%s1214] sm:$0x3]
        %v1216 = vpack.c.bf16 %v1212, %v1212
        %v1217 = vpack.c.bf16 %v1213, %v1213
        %v1219 = vsel %vm411, %v1215, 0
        %v1222 = vsel %vm415, %v1216, 0
        %v1225 = vsel %vm415, %v1217, 0
        %1227 = vmatpush.bf16.msra.mxu0 0
        %1228 = vmatpush.bf16.msra.mxu0 0
        %1229 = vmatpush.bf16.msra.mxu0 0
        %1230 = vmatpush.bf16.msra.mxu0 0
        %1231 = vmatpush.bf16.msra.mxu0 0
        %1232 = vmatpush.bf16.msra.mxu0 0
        %1233 = vmatpush.bf16.msra.mxu0 0
        %1234 = vmatpush.bf16.msra.mxu0 %v1222
        %1235 = vmatmul.bf16.gmra.mxu0 %v1219
        %v1236 = vpop.f32.mrf.mxu0
        %v1237 = vadd.f32 0.0, %v1236
        %v1238 = vpop.f32.mrf.mxu0
        %1239 = vdwg.mxu0
        %1240 = vmatpush.bf16.msra.mxu0 0
        %1241 = vmatpush.bf16.msra.mxu0 0
        %1242 = vmatpush.bf16.msra.mxu0 0
        %1243 = vmatpush.bf16.msra.mxu0 0
        %1244 = vmatpush.bf16.msra.mxu0 0
        %1245 = vmatpush.bf16.msra.mxu0 0
        %1246 = vmatpush.bf16.msra.mxu0 0
        %1247 = vmatpush.bf16.msra.mxu0 %v1225
        %1248 = vmatmul.bf16.gmra.mxu0 %v1219
        %v1249 = vpop.f32.mrf.mxu0
        %v1250 = vadd.f32 0.0, %v1249
        %v1251 = vpop.f32.mrf.mxu0
        %1252 = vdwg.mxu0
        %v1253 = vadd.f32 %v1204, %v1237
        %v1254 = vadd.f32 %v1205, %v1250
        %1255 = vrot.lane.b32.xlu0 %v874, 111
        %v1256 = vpop.permute.xlu0 %1255
        %1257 = vrot.lane.b32.xlu0 %v875, 111
        %v1258 = vpop.permute.xlu0 %1257
        %v1259 = vsel %vm813, %v1256, %v1258
        %v1260 = vsel %vm813, %v1258, %v1256
        %v1261 = vmul.f32 %v1259, %v819
        %v1262 = vmul.f32 %v1260, %v820
        %s1263 = scalar_lea.vmem %s5, 16
        %v1264 = vld [vmem:[%s1263] sm:$0x3]
        %v1265 = vpack.c.bf16 %v1261, %v1261
        %v1266 = vpack.c.bf16 %v1262, %v1262
        %v1268 = vsel %vm411, %v1264, 0
        %v1271 = vsel %vm415, %v1265, 0
        %v1274 = vsel %vm415, %v1266, 0
        %1276 = vmatpush.bf16.msra.mxu0 0
        %1277 = vmatpush.bf16.msra.mxu0 0
        %1278 = vmatpush.bf16.msra.mxu0 0
        %1279 = vmatpush.bf16.msra.mxu0 0
        %1280 = vmatpush.bf16.msra.mxu0 0
        %1281 = vmatpush.bf16.msra.mxu0 0
        %1282 = vmatpush.bf16.msra.mxu0 0
        %1283 = vmatpush.bf16.msra.mxu0 %v1271
        %1284 = vmatmul.bf16.gmra.mxu0 %v1268
        %v1285 = vpop.f32.mrf.mxu0
        %v1286 = vadd.f32 0.0, %v1285
        %v1287 = vpop.f32.mrf.mxu0
        %1288 = vdwg.mxu0
        %1289 = vmatpush.bf16.msra.mxu0 0
        %1290 = vmatpush.bf16.msra.mxu0 0
        %1291 = vmatpush.bf16.msra.mxu0 0
        %1292 = vmatpush.bf16.msra.mxu0 0
        %1293 = vmatpush.bf16.msra.mxu0 0
        %1294 = vmatpush.bf16.msra.mxu0 0
        %1295 = vmatpush.bf16.msra.mxu0 0
        %1296 = vmatpush.bf16.msra.mxu0 %v1274
        %1297 = vmatmul.bf16.gmra.mxu0 %v1268
        %v1298 = vpop.f32.mrf.mxu0
        %v1299 = vadd.f32 0.0, %v1298
        %v1300 = vpop.f32.mrf.mxu0
        %1301 = vdwg.mxu0
        %v1302 = vadd.f32 %v1253, %v1286
        %v1303 = vadd.f32 %v1254, %v1299
        %v1304 = vld [vmem:[%s6] sm:$0xf]
        %1306 = vset.pattern.permute.xlu0 0
        %1307 = vperm.xlu0 %1306, %v1304
        %v1308 = vpop.permute.xlu0 %1307
        %v1310 = vadd.f32 %v1302, %v1308
        %v1311 = vadd.f32 %v1303, %v1308
        %v1312 = vadd.f32 %v1310, %v355
        %v1313 = vadd.f32 %v1311, %v368
        %v1314 = vmax.f32 %v1312, 0.0
        %v1315 = vmax.f32 %v1313, 0.0
        %v1318 = vrot.slane %v1315, 4
        %vm1319 = vcmask 1043456
        %v1320 = vsel %vm1319, %v1314, %v1318
        %1322 = vst [vmem:[%s286] sm:$0xff] %v1320
        %s1323 = sand.u32 %s182, 1
        %s1324 = scalar_lea.sflag [#allocation4], %s1323
        %s1325 = sand.u32 %s182, 1
        %s1326 = smul.addr %s1325, 8
        %s1327 = scalar_lea.vmem [#allocation5], %s1326
        // Predicated region
        $region53: #{tpu_custom_call.1} parent=47 // pred_check
          %p1328 = pneg %p192
        $region54: #{tpu_custom_call.1} parent=47 // pred_check_branch
          %1330 = sbr.rel (%p1328) target = $region56
        $region55: #{tpu_custom_call.1} parent=47 // pred_region
          %1332 = vsyncadd %s1324, 0
          %s1333 = smul.addr %s22, 2
          %s1334 = smul.addr %s1333, 4
          %s1335 = scalar_lea.hbm %s7, %s1334
          %s1337 = sshll.u32 %s1327, 4
          %s1338 = int_to_ptr.vmem [resolvable:$true] %s1337
          %s1339 = sshll.u32 %s1335, 4
          %s1340 = int_to_ptr.hbm [resolvable:$true] %s1339
          %1342 = dma.vmem_to_hbm [thread:$0]  %s1338, 128, %s1340, %s1324
        $region56: #{tpu_custom_call.1} parent=47 // pred_fallthru
          _
      $region48: #{tpu_custom_call.1} parent=5 // pred_fallthru
        _
      %p1343 = scmp.le.s32.totalorder 2, %s17
      // Predicated region
      $region57: #{tpu_custom_call.1} parent=5 // pred_check
        %p1344 = pneg %p1343
      $region58: #{tpu_custom_call.1} parent=5 // pred_check_branch
        %1346 = sbr.rel (%p1344) target = $region60
      $region59: #{tpu_custom_call.1} parent=5 // pred_region
        %s1347 = ssub.s32 %s17, 2
        // Predicated region
        $region61: #{tpu_custom_call.1} parent=59 // pred_check
          %p1348 = pneg %p198
        $region62: #{tpu_custom_call.1} parent=59 // pred_check_branch
          %1350 = sbr.rel (%p1348) target = $region64
        $region63: #{tpu_custom_call.1} parent=59 // pred_region
          %s1351 = sand.u32 %s183, 1
          %s1352 = scalar_lea.sflag [#allocation4], %s1351
          %s1353 = sand.u32 %s183, 1
          %s1354 = smul.addr %s1353, 8
          %s1355 = scalar_lea.vmem [#allocation5], %s1354
          %1357 = dma.done %s1352, 128
        $region64: #{tpu_custom_call.1} parent=59 // pred_fallthru
          _
      $region60: #{tpu_custom_call.1} parent=5 // pred_fallthru
        _
    $region6: #{tpu_custom_call.1} parent=1 // loop_footer
      %s21 = sadd.s32 1, %s17
    $region7: #{tpu_custom_call.1} parent=1 // loop_footer_branch
      %16 = sbr.rel target = $region3
    $region8: #{tpu_custom_call.1} parent=1 // loop_exit
      _
    %1358 = vsyncpa [#allocation3], 1
    %s1359 = scalar_lea.sflag [#allocation3], 1
    %1360 = vsyncpa %s1359, 1
    %1361 = vsyncpa [#allocation4], 1
    %s1362 = scalar_lea.sflag [#allocation4], 1
    %1363 = vsyncpa %s1362, 1

</llo_original>
